<compile_context>
chip_gen: v6e
topology: v6e:2x2x1
jax: 0.10.0
libtpu: 0.0.40
codegen_flags: <defaults>
</compile_context>

<pallas_src>
import jax
import jax.numpy as jnp
from jax.experimental import pallas as pl
from jax.experimental.pallas import tpu as pltpu


def _round_up(x, m):
    return ((x + m - 1) // m) * m


def fc_kernel(x_ref, w1_ref, c1_ref, w2_ref, b2_ref, o_ref):
    # Layer 1: 1x1 conv == per-row matmul against the block-diagonal folded
    # (conv-bias + eval-mode BN) weight.  x streams as f32 and is cast to the
    # MXU dtype here (VPU op) instead of in a separate wrapper-side HBM pass.
    x = x_ref[...].astype(w1_ref.dtype)
    h = jnp.dot(x, w1_ref[...], preferred_element_type=jnp.float32)
    h = jnp.maximum(h + c1_ref[...], 0.0)                     # folded BN + ReLU
    # Layer 2: 1x1 conv + bias, activation = None (no BN created for it).
    y = jnp.dot(h.astype(w2_ref.dtype), w2_ref[...],
                preferred_element_type=jnp.float32)
    o_ref[...] = (y + b2_ref[...]).astype(o_ref.dtype)


def _pick_tile(Mg, k_in, k_mid, k_out, tm_req, vmem_budget):
    """Largest sublane-aligned packed-row tile that fits the VMEM budget,
    capped so the grid keeps >= 8 steps (>= 4 per TensorCore on v7x)."""
    lane = lambda n: _round_up(max(n, 1), 128)
    sub = lambda n: _round_up(max(n, 1), 16)
    # resident weight / bias tiles (x2: the pipeline may double-buffer inputs)
    weight_bytes = 2 * (sub(k_in) * lane(k_mid) * 2
                        + sub(k_mid) * lane(k_out) * 2
                        + 8 * lane(k_mid) * 4 + 8 * lane(k_out) * 4)
    # per packed row: double-buffered f32 x / out tiles + live in-body values
    # (bf16 x copy, f32 + bf16 h, f32 y) that Mosaic keeps in VMEM.
    per_row = (2 * lane(k_in) * 4 + 2 * lane(k_out) * 4
               + lane(k_in) * 2 + lane(k_mid) * 6 + lane(k_out) * 4)
    if Mg <= 8:
        return Mg, weight_bytes, per_row            # single full-extent block
    tm = min(tm_req, max(8, (vmem_budget - weight_bytes) // per_row))
    tm = min(tm, _round_up(pl.cdiv(Mg, 8), 8))      # keep >= 8 grid steps
    tm = max(8, (tm // 8) * 8)                      # sublane aligned
    return tm, weight_bytes, per_row


def fc_forward(x, params, *, tm=512, w_dtype=jnp.bfloat16,
               out_dtype=jnp.float32, vmem_budget=40 * 2**20):
    """x: [B, N1, N2, C_in] float32 -> [B, N1, N2, H2] out_dtype.

    Inference semantics of FC(units=[H1, H2], activations=[ReLU, None],
    bn=True, use_bias=True).  Dropout only runs in training and is skipped.
    Pass out_dtype=jnp.bfloat16 on v5e if downstream tolerates it.
    """
    w1, b1, s1, t1, w2, b2 = params
    B, N1, N2, C_in = x.shape
    H1, H2 = w1.shape[1], w2.shape[1]
    M = B * N1 * N2

    # Fold conv bias + eval-mode BatchNorm into layer-1 weight / shift:
    #   (x @ w1 + b1) * s1 + t1  ==  x @ (w1 * s1) + (b1 * s1 + t1)
    w1f = w1 * s1
    c1 = b1 * s1 + t1

    # Lane-dense packing: G samples per 128-lane row, block-diagonal weights.
    G = 128 // C_in if (C_in <= 128 and 128 % C_in == 0) else 1
    eye = jnp.eye(G, dtype=jnp.float32)
    w1_bd = jnp.kron(eye, w1f).astype(w_dtype)            # (G*C_in, G*H1)
    w2_bd = jnp.kron(eye, w2.astype(jnp.float32)).astype(w_dtype)  # (G*H1, G*H2)
    c1_bd = jnp.tile(c1.astype(jnp.float32), (1, G))      # (1, G*H1)
    b2_bd = jnp.tile(b2.astype(jnp.float32), (1, G))      # (1, G*H2)
    Kin, Kmid, Kout = G * C_in, G * H1, G * H2

    # Free row-major reshape (no HBM copy).  Pad only to the pack multiple G
    # (corner case: M % G != 0).
    Mp = _round_up(M, G)
    xf = x.reshape(M, C_in)
    if Mp != M:
        # TODO(synk): this pad (and the matching output slice) is still a full
        # XLA copy; it only triggers when M is not a multiple of G.
        xf = jnp.pad(xf, ((0, Mp - M), (0, 0)))
    Mg = Mp // G
    x2d = xf.reshape(Mg, Kin)

    tm_eff, w_bytes, per_row = _pick_tile(Mg, Kin, Kmid, Kout, tm, vmem_budget)
    grid = pl.cdiv(Mg, tm_eff)              # ragged tail handled by OOB masking

    # Generation-aware VMEM ceiling: <= 3/4 of physical per-core VMEM.
    try:
        vmem_cap = int(pltpu.get_tpu_info().vmem_capacity_bytes)
    except Exception:
        vmem_cap = 64 * 2**20               # conservative (v7x per-TC size)
    vmem_need = w_bytes + tm_eff * per_row + (4 << 20)
    vmem_limit = int(min(max(vmem_need, 16 * 2**20), (vmem_cap * 3) // 4))

    out2d = pl.pallas_call(
        fc_kernel,
        out_shape=jax.ShapeDtypeStruct((Mg, Kout), out_dtype),
        grid_spec=pltpu.PrefetchScalarGridSpec(
            num_scalar_prefetch=0,
            grid=(grid,),
            in_specs=[
                pl.BlockSpec((tm_eff, Kin), lambda i: (i, 0)),   # packed x rows (f32)
                pl.BlockSpec((Kin, Kmid),   lambda i: (0, 0)),   # block-diag W1*s1
                pl.BlockSpec((1, Kmid),     lambda i: (0, 0)),   # tiled b1*s1 + t1
                pl.BlockSpec((Kmid, Kout),  lambda i: (0, 0)),   # block-diag W2
                pl.BlockSpec((1, Kout),     lambda i: (0, 0)),   # tiled b2
            ],
            out_specs=pl.BlockSpec((tm_eff, Kout), lambda i: (i, 0)),
        ),
        compiler_params=pltpu.CompilerParams(
            dimension_semantics=("parallel",),
            vmem_limit_bytes=vmem_limit,
        ),
    )(x2d, w1_bd, c1_bd, w2_bd, b2_bd)

    out = out2d.reshape(Mp, H2)             # free row-major unpack
    if Mp != M:
        out = out[:M]
    return out.reshape(B, N1, N2, H2)


def make_params(key, c_in, h1, h2, eps=1e-5):
    """Deterministic synthetic parameters for
    FC(in_features=c_in, units=[h1, h2], activations=[ReLU, None], bn=True,
    use_bias=True), with eval-mode BatchNorm expressed as scale/shift."""
    k = jax.random.split(key, 6)
    # Conv2d 1x1 weights stored as [in, out] for row-major matmul.
    w1 = jax.random.normal(k[0], (c_in, h1), jnp.float32) * 0.1
    b1 = jax.random.normal(k[1], (1, h1), jnp.float32) * 0.1
    w2 = jax.random.normal(k[2], (h1, h2), jnp.float32) * 0.1
    b2 = jax.random.normal(k[3], (1, h2), jnp.float32) * 0.1
    # BatchNorm2d params + running stats (eval mode) -> scale/shift.
    gamma = 1.0 + 0.05 * jax.random.normal(k[4], (1, h1), jnp.float32)
    beta = 0.05 * jax.random.normal(k[5], (1, h1), jnp.float32)
    run_mean = jnp.zeros((1, h1), jnp.float32)
    run_var = jnp.ones((1, h1), jnp.float32)
    scale = gamma / jnp.sqrt(run_var + eps)
    shift = beta - run_mean * scale
    return (w1, b1, scale, shift, w2, b2)


def fc_reference(x, params):
    w1, b1, s1, t1, w2, b2 = params
    h = jnp.maximum((x @ w1 + b1) * s1 + t1, 0.0)
    return h @ w2 + b2


if __name__ == "__main__":
    key = jax.random.PRNGKey(0)
    kx, kp, kx2 = jax.random.split(key, 3)

    # x as passed to FC.forward: [B, N1, N2, C_in]; units=[32, 16],
    # activations=[ReLU, None], bn=True, use_bias=True.
    B, N1, N2, C_in = 2, 8, 16, 4
    H1, H2 = 32, 16

    params = make_params(kp, C_in, H1, H2)

    # Main test: pack-aligned shape.
    x = jax.random.normal(kx, (B, N1, N2, C_in), jnp.float32)
    out = jax.block_until_ready(fc_forward(x, params))
    ref = fc_reference(x, params)
    assert out.shape == (B, N1, N2, H2)
    assert jnp.allclose(out, ref, atol=2e-2, rtol=2e-2), "mismatch vs reference"

    # Tail test: M not a multiple of the pack group / row tile -> exercises the
    # ragged (OOB-masked) last row-block and the pack-pad corner case.
    B2, N1b, N2b = 3, 7, 19
    x2 = jax.random.normal(kx2, (B2, N1b, N2b, C_in), jnp.float32)
    out2 = jax.block_until_ready(fc_forward(x2, params))
    ref2 = fc_reference(x2, params)
    assert out2.shape == (B2, N1b, N2b, H2)
    assert jnp.allclose(out2, ref2, atol=2e-2, rtol=2e-2), "tail mismatch"

    print("KERNEL_OK")
</pallas_src>

<mosaic_0001>
module attributes {stable_mosaic.version = 11 : i64} {
  func.func @fc_kernel(%arg0: i32, %arg1: memref<8x128xf32, #tpu.memory_space<vmem>>, %arg2: memref<128x1024xbf16, #tpu.memory_space<vmem>>, %arg3: memref<1x1024xf32, #tpu.memory_space<vmem>>, %arg4: memref<1024x512xbf16, #tpu.memory_space<vmem>>, %arg5: memref<1x512xf32, #tpu.memory_space<vmem>>, %arg6: memref<8x512xf32, #tpu.memory_space<vmem>>) attributes {dimension_semantics = [#tpu.dimension_semantics<parallel>], iteration_bounds = array<i64: 1>, scalar_prefetch = 0 : i64, scratch_operands = 0 : i64, tpu.core_type = #tpu.core_type<tc>, window_params = [{transform_indices = @transform_0, window_bounds = array<i64: 8, 128>}, {pipeline_mode = #tpu.pipeline_mode<synchronous>, transform_indices = @transform_1, window_bounds = array<i64: 128, 1024>}, {pipeline_mode = #tpu.pipeline_mode<synchronous>, transform_indices = @transform_2, window_bounds = array<i64: 1, 1024>}, {pipeline_mode = #tpu.pipeline_mode<synchronous>, transform_indices = @transform_3, window_bounds = array<i64: 1024, 512>}, {pipeline_mode = #tpu.pipeline_mode<synchronous>, transform_indices = @transform_4, window_bounds = array<i64: 1, 512>}, {transform_indices = @transform_5, window_bounds = array<i64: 8, 512>}]} {
    %c0 = arith.constant 0 : index
    %c0_0 = arith.constant 0 : index
    %0 = vector.load %arg1[%c0, %c0_0] : memref<8x128xf32, #tpu.memory_space<vmem>>, vector<8x128xf32>
    %1 = arith.truncf %0 : vector<8x128xf32> to vector<8x128xbf16>
    %c0_1 = arith.constant 0 : index
    %c0_2 = arith.constant 0 : index
    %2 = vector.load %arg2[%c0_1, %c0_2] : memref<128x1024xbf16, #tpu.memory_space<vmem>>, vector<128x1024xbf16>
    %cst = arith.constant dense<0.000000e+00> : vector<8x1024xf32>
    %3 = tpu.matmul %1, %2, %cst {dimension_numbers = #tpu.dot_dimension_numbers<[1], [0], [0], [1], [0, 0, 1, 1], [], []>} : vector<8x128xbf16>, vector<128x1024xbf16>, vector<8x1024xf32> -> vector<8x1024xf32>
    %c0_3 = arith.constant 0 : index
    %c0_4 = arith.constant 0 : index
    %4 = vector.load %arg3[%c0_3, %c0_4] : memref<1x1024xf32, #tpu.memory_space<vmem>>, vector<1x1024xf32>
    %5 = vector.broadcast %4 : vector<1x1024xf32> to vector<8x1024xf32>
    %6 = arith.addf %3, %5 : vector<8x1024xf32>
    %cst_5 = arith.constant 0.000000e+00 : f32
    %7 = vector.broadcast %cst_5 : f32 to vector<8x1024xf32>
    %8 = arith.maximumf %6, %7 : vector<8x1024xf32>
    %9 = arith.truncf %8 : vector<8x1024xf32> to vector<8x1024xbf16>
    %c0_6 = arith.constant 0 : index
    %c0_7 = arith.constant 0 : index
    %10 = vector.load %arg4[%c0_6, %c0_7] : memref<1024x512xbf16, #tpu.memory_space<vmem>>, vector<1024x512xbf16>
    %cst_8 = arith.constant dense<0.000000e+00> : vector<8x512xf32>
    %11 = tpu.matmul %9, %10, %cst_8 {dimension_numbers = #tpu.dot_dimension_numbers<[1], [0], [0], [1], [0, 0, 1, 1], [], []>} : vector<8x1024xbf16>, vector<1024x512xbf16>, vector<8x512xf32> -> vector<8x512xf32>
    %c0_9 = arith.constant 0 : index
    %c0_10 = arith.constant 0 : index
    %12 = vector.load %arg5[%c0_9, %c0_10] : memref<1x512xf32, #tpu.memory_space<vmem>>, vector<1x512xf32>
    %13 = vector.broadcast %12 : vector<1x512xf32> to vector<8x512xf32>
    %14 = arith.addf %11, %13 : vector<8x512xf32>
    %c0_11 = arith.constant 0 : index
    %c0_12 = arith.constant 0 : index
    %15 = vector.load %arg6[%c0_11, %c0_12] : memref<8x512xf32, #tpu.memory_space<vmem>>, vector<8x512xf32>
    tpu.vector_store %arg6[%c0_11, %c0_12], %14 {strides = array<i32>} : memref<8x512xf32, #tpu.memory_space<vmem>>, vector<8x512xf32>,
    return
  }
  func.func @transform_0(%arg0: i32) -> (i32, i32) {
    %c0_i32 = arith.constant 0 : i32
    %c0_i32_0 = arith.constant 0 : i32
    return %arg0, %c0_i32 : i32, i32
  }
  func.func @transform_1(%arg0: i32) -> (i32, i32) {
    %c0_i32 = arith.constant 0 : i32
    %c0_i32_0 = arith.constant 0 : i32
    %c0_i32_1 = arith.constant 0 : i32
    return %c0_i32, %c0_i32_0 : i32, i32
  }
  func.func @transform_2(%arg0: i32) -> (i32, i32) {
    %c0_i32 = arith.constant 0 : i32
    %c0_i32_0 = arith.constant 0 : i32
    %c0_i32_1 = arith.constant 0 : i32
    return %c0_i32, %c0_i32_0 : i32, i32
  }
  func.func @transform_3(%arg0: i32) -> (i32, i32) {
    %c0_i32 = arith.constant 0 : i32
    %c0_i32_0 = arith.constant 0 : i32
    %c0_i32_1 = arith.constant 0 : i32
    return %c0_i32, %c0_i32_0 : i32, i32
  }
  func.func @transform_4(%arg0: i32) -> (i32, i32) {
    %c0_i32 = arith.constant 0 : i32
    %c0_i32_0 = arith.constant 0 : i32
    %c0_i32_1 = arith.constant 0 : i32
    return %c0_i32, %c0_i32_0 : i32, i32
  }
  func.func @transform_5(%arg0: i32) -> (i32, i32) {
    %c0_i32 = arith.constant 0 : i32
    %c0_i32_0 = arith.constant 0 : i32
    return %arg0, %c0_i32 : i32, i32
  }
}

</mosaic_0001>

<llo_original>
// kernel: tpu_custom_call.1
$region0: #{tpu_custom_call.1}
  #allocation0 [shape = 'u32[]', space=smem, size = 0x4, offset = 0x4, fixed_abs, tag = 'smem constant byte address 0x4 - core index']
  #allocation1 [shape = 'u32[144,128]{1,0:T(1,128)}', space=vmem, size = 0x12000, scoped, tag = 'internal scratch']
  %s0 = inlined_call_operand.hbm [shape: f32[8,128], index: 0, kind: input, shape index: {}]
  %s1 = inlined_call_operand.hbm [shape: bf16[128,1024], index: 1, kind: input, shape index: {}]
  %s2 = inlined_call_operand.hbm [shape: f32[1,1024], index: 2, kind: input, shape index: {}]
  %s3 = inlined_call_operand.hbm [shape: bf16[1024,512], index: 3, kind: input, shape index: {}]
  %s4 = inlined_call_operand.vmem [shape: f32[1,512], index: 4, kind: input, shape index: {}]
  %s5 = inlined_call_operand.hbm [shape: f32[8,512], index: 5, kind: output, shape index: {}]
  %s6 = sld [smem:[#allocation0]]
  $region46: #{tpu_custom_call.1} parent=0
    _
  %s8 = ssub.s32 1, %s6
  %s9 = scalar_select 0, %s8, %s6
  $region1: #{tpu_custom_call.1} parent=0
    #allocation2 [shape = 'u8[4096]{0}', space=vmem, size = 0x1000, scoped, tag = 'input window, operand 0, single buffered']
    #allocation3 [shape = 's32[1]{0}', space=sflag, size = 0x4, scoped, tag = 'scoped memory for tpu_custom_call.1']
    #allocation4 [shape = 's32[1]{0}', space=sflag, size = 0x4, scoped, tag = 'scoped memory for tpu_custom_call.1']
    #allocation5 [shape = 'u8[262144]{0}', space=vmem, size = 0x40000, scoped, tag = 'input window, operand 1, single buffered']
    #allocation6 [shape = 's32[1]{0}', space=sflag, size = 0x4, scoped, tag = 'scoped memory for tpu_custom_call.1']
    #allocation7 [shape = 'u8[4096]{0}', space=vmem, size = 0x1000, scoped, tag = 'input window, operand 2, single buffered']
    #allocation8 [shape = 'u8[1048576]{0}', space=vmem, size = 0x100000, scoped, tag = 'input window, operand 3, single buffered']
    #allocation9 [shape = 's32[1]{0}', space=sflag, size = 0x4, scoped, tag = 'scoped memory for tpu_custom_call.1']
    #allocation10 [shape = 'u8[16384]{0}', space=vmem, size = 0x4000, scoped, tag = 'output window, operand 0, single buffered']
    %10 = vsyncpa [#allocation3], 0
    %11 = vsyncpa [#allocation6], 0
    %12 = vsyncpa [#allocation9], 0
    %13 = vsyncpa [#allocation4], 0
    // Predicated region
    $region2: #{tpu_custom_call.1} parent=1 // pred_check
      _
    $region3: #{tpu_custom_call.1} parent=1 // pred_check_branch
      %15 = sbr.rel (0) target = $region5
    $region4: #{tpu_custom_call.1} parent=1 // pred_region
      %s17 = ssub.s32 128, 128
      %18 = vsyncadd [#allocation3], %s17
      %s20 = sshll.u32 [#allocation2], 4
      %s21 = int_to_ptr.vmem [resolvable:$true] %s20
      %23 = dma.hbm_to_vmem [thread:$0]  %s0, 128, %s21, [#allocation3]
    $region5: #{tpu_custom_call.1} parent=1 // pred_fallthru
      _
    // Predicated region
    $region6: #{tpu_custom_call.1} parent=1 // pred_check
      _
    $region7: #{tpu_custom_call.1} parent=1 // pred_check_branch
      %25 = sbr.rel (0) target = $region9
    $region8: #{tpu_custom_call.1} parent=1 // pred_region
      %s27 = ssub.s32 8192, 8192
      %28 = vsyncadd [#allocation6], %s27
      %s29 = sshll.u32 [#allocation5], 4
      %s30 = int_to_ptr.vmem [resolvable:$true] %s29
      %35 = dma.hbm_to_vmem [thread:$0]  %s1, 8192, %s30, [#allocation6], 512, 512, 32
    $region9: #{tpu_custom_call.1} parent=1 // pred_fallthru
      _
    // Predicated region
    $region10: #{tpu_custom_call.1} parent=1 // pred_check
      _
    $region11: #{tpu_custom_call.1} parent=1 // pred_check_branch
      %37 = sbr.rel (0) target = $region13
    $region12: #{tpu_custom_call.1} parent=1 // pred_region
      %s39 = ssub.s32 128, 128
      %40 = vsyncadd [#allocation6], %s39
      %s42 = sshll.u32 [#allocation7], 4
      %s43 = int_to_ptr.vmem [resolvable:$true] %s42
      %45 = dma.hbm_to_vmem [thread:$0]  %s2, 128, %s43, [#allocation6]
    $region13: #{tpu_custom_call.1} parent=1 // pred_fallthru
      _
    // Predicated region
    $region14: #{tpu_custom_call.1} parent=1 // pred_check
      _
    $region15: #{tpu_custom_call.1} parent=1 // pred_check_branch
      %47 = sbr.rel (0) target = $region17
    $region16: #{tpu_custom_call.1} parent=1 // pred_region
      %s49 = ssub.s32 32768, 32768
      %50 = vsyncadd [#allocation9], %s49
      %s51 = sshll.u32 [#allocation8], 4
      %s52 = int_to_ptr.vmem [resolvable:$true] %s51
      %57 = dma.hbm_to_vmem [thread:$0]  %s3, 32768, %s52, [#allocation9], 256, 256, 16
    $region17: #{tpu_custom_call.1} parent=1 // pred_fallthru
      _
    // Predicated region
    $region18: #{tpu_custom_call.1} parent=1 // pred_check
      _
    $region19: #{tpu_custom_call.1} parent=1 // pred_check_branch
      %59 = sbr.rel (0) target = $region21
    $region20: #{tpu_custom_call.1} parent=1 // pred_region
      _
    $region21: #{tpu_custom_call.1} parent=1 // pred_fallthru
      _
    // Predicated region
    $region22: #{tpu_custom_call.1} parent=1 // pred_check
      _
    $region23: #{tpu_custom_call.1} parent=1 // pred_check_branch
      %61 = sbr.rel (0) target = $region25
    $region24: #{tpu_custom_call.1} parent=1 // pred_region
      %62 = dma.done [#allocation3], 128
    $region25: #{tpu_custom_call.1} parent=1 // pred_fallthru
      _
    // Predicated region
    $region26: #{tpu_custom_call.1} parent=1 // pred_check
      _
    $region27: #{tpu_custom_call.1} parent=1 // pred_check_branch
      %64 = sbr.rel (0) target = $region29
    $region28: #{tpu_custom_call.1} parent=1 // pred_region
      %65 = dma.done [#allocation6], 8192
    $region29: #{tpu_custom_call.1} parent=1 // pred_fallthru
      _
    // Predicated region
    $region30: #{tpu_custom_call.1} parent=1 // pred_check
      _
    $region31: #{tpu_custom_call.1} parent=1 // pred_check_branch
      %67 = sbr.rel (0) target = $region33
    $region32: #{tpu_custom_call.1} parent=1 // pred_region
      %68 = dma.done [#allocation6], 128
    $region33: #{tpu_custom_call.1} parent=1 // pred_fallthru
      _
    // Predicated region
    $region34: #{tpu_custom_call.1} parent=1 // pred_check
      _
    $region35: #{tpu_custom_call.1} parent=1 // pred_check_branch
      %70 = sbr.rel (0) target = $region37
    $region36: #{tpu_custom_call.1} parent=1 // pred_region
      %71 = dma.done [#allocation9], 32768
    $region37: #{tpu_custom_call.1} parent=1 // pred_fallthru
      _
    %v73 = vld [vmem:[#allocation2] sm:$0xff]
    %v74 = vpack.c.bf16 %v73, %v73
    %v75 = vld [vmem:[#allocation5] sm:$0xff]
    %v76 = vld [vmem:[#allocation5 + $0x8] sm:$0xff]
    %v77 = vld [vmem:[#allocation5 + $0x10] sm:$0xff]
    %v78 = vld [vmem:[#allocation5 + $0x18] sm:$0xff]
    %v79 = vld [vmem:[#allocation5 + $0x20] sm:$0xff]
    %v80 = vld [vmem:[#allocation5 + $0x28] sm:$0xff]
    %v81 = vld [vmem:[#allocation5 + $0x30] sm:$0xff]
    %v82 = vld [vmem:[#allocation5 + $0x38] sm:$0xff]
    %v83 = vld [vmem:[#allocation5 + $0x40] sm:$0xff]
    %v84 = vld [vmem:[#allocation5 + $0x48] sm:$0xff]
    %v85 = vld [vmem:[#allocation5 + $0x50] sm:$0xff]
    %v86 = vld [vmem:[#allocation5 + $0x58] sm:$0xff]
    %v87 = vld [vmem:[#allocation5 + $0x60] sm:$0xff]
    %v88 = vld [vmem:[#allocation5 + $0x68] sm:$0xff]
    %v89 = vld [vmem:[#allocation5 + $0x70] sm:$0xff]
    %v90 = vld [vmem:[#allocation5 + $0x78] sm:$0xff]
    %v91 = vld [vmem:[#allocation5 + $0x80] sm:$0xff]
    %v92 = vld [vmem:[#allocation5 + $0x88] sm:$0xff]
    %v93 = vld [vmem:[#allocation5 + $0x90] sm:$0xff]
    %v94 = vld [vmem:[#allocation5 + $0x98] sm:$0xff]
    %v95 = vld [vmem:[#allocation5 + $0xa0] sm:$0xff]
    %v96 = vld [vmem:[#allocation5 + $0xa8] sm:$0xff]
    %v97 = vld [vmem:[#allocation5 + $0xb0] sm:$0xff]
    %v98 = vld [vmem:[#allocation5 + $0xb8] sm:$0xff]
    %v99 = vld [vmem:[#allocation5 + $0xc0] sm:$0xff]
    %v100 = vld [vmem:[#allocation5 + $0xc8] sm:$0xff]
    %v101 = vld [vmem:[#allocation5 + $0xd0] sm:$0xff]
    %v102 = vld [vmem:[#allocation5 + $0xd8] sm:$0xff]
    %v103 = vld [vmem:[#allocation5 + $0xe0] sm:$0xff]
    %v104 = vld [vmem:[#allocation5 + $0xe8] sm:$0xff]
    %v105 = vld [vmem:[#allocation5 + $0xf0] sm:$0xff]
    %v106 = vld [vmem:[#allocation5 + $0xf8] sm:$0xff]
    %v107 = vld [vmem:[#allocation5 + $0x100] sm:$0xff]
    %v108 = vld [vmem:[#allocation5 + $0x108] sm:$0xff]
    %v109 = vld [vmem:[#allocation5 + $0x110] sm:$0xff]
    %v110 = vld [vmem:[#allocation5 + $0x118] sm:$0xff]
    %v111 = vld [vmem:[#allocation5 + $0x120] sm:$0xff]
    %v112 = vld [vmem:[#allocation5 + $0x128] sm:$0xff]
    %v113 = vld [vmem:[#allocation5 + $0x130] sm:$0xff]
    %v114 = vld [vmem:[#allocation5 + $0x138] sm:$0xff]
    %v115 = vld [vmem:[#allocation5 + $0x140] sm:$0xff]
    %v116 = vld [vmem:[#allocation5 + $0x148] sm:$0xff]
    %v117 = vld [vmem:[#allocation5 + $0x150] sm:$0xff]
    %v118 = vld [vmem:[#allocation5 + $0x158] sm:$0xff]
    %v119 = vld [vmem:[#allocation5 + $0x160] sm:$0xff]
    %v120 = vld [vmem:[#allocation5 + $0x168] sm:$0xff]
    %v121 = vld [vmem:[#allocation5 + $0x170] sm:$0xff]
    %v122 = vld [vmem:[#allocation5 + $0x178] sm:$0xff]
    %v123 = vld [vmem:[#allocation5 + $0x180] sm:$0xff]
    %v124 = vld [vmem:[#allocation5 + $0x188] sm:$0xff]
    %v125 = vld [vmem:[#allocation5 + $0x190] sm:$0xff]
    %v126 = vld [vmem:[#allocation5 + $0x198] sm:$0xff]
    %v127 = vld [vmem:[#allocation5 + $0x1a0] sm:$0xff]
    %v128 = vld [vmem:[#allocation5 + $0x1a8] sm:$0xff]
    %v129 = vld [vmem:[#allocation5 + $0x1b0] sm:$0xff]
    %v130 = vld [vmem:[#allocation5 + $0x1b8] sm:$0xff]
    %v131 = vld [vmem:[#allocation5 + $0x1c0] sm:$0xff]
    %v132 = vld [vmem:[#allocation5 + $0x1c8] sm:$0xff]
    %v133 = vld [vmem:[#allocation5 + $0x1d0] sm:$0xff]
    %v134 = vld [vmem:[#allocation5 + $0x1d8] sm:$0xff]
    %v135 = vld [vmem:[#allocation5 + $0x1e0] sm:$0xff]
    %v136 = vld [vmem:[#allocation5 + $0x1e8] sm:$0xff]
    %v137 = vld [vmem:[#allocation5 + $0x1f0] sm:$0xff]
    %v138 = vld [vmem:[#allocation5 + $0x1f8] sm:$0xff]
    %v139 = vld [vmem:[#allocation7] sm:$0xff]
    %v141 = vlaneseq
    %v142 = vshrl.u32 %v141, 7
    %v143 = vsub.s32 0, %v142
    %v144 = vrot.slane %v139, %v143
    %v145 = vlaneseq
    %v146 = vshrl.u32 %v145, 7
    %v147 = vsub.s32 1, %v146
    %v148 = vrot.slane %v139, %v147
    %v149 = vlaneseq
    %v150 = vshrl.u32 %v149, 7
    %v151 = vsub.s32 2, %v150
    %v152 = vrot.slane %v139, %v151
    %v153 = vlaneseq
    %v154 = vshrl.u32 %v153, 7
    %v155 = vsub.s32 3, %v154
    %v156 = vrot.slane %v139, %v155
    %v157 = vlaneseq
    %v158 = vshrl.u32 %v157, 7
    %v159 = vsub.s32 4, %v158
    %v160 = vrot.slane %v139, %v159
    %v161 = vlaneseq
    %v162 = vshrl.u32 %v161, 7
    %v163 = vsub.s32 5, %v162
    %v164 = vrot.slane %v139, %v163
    %v165 = vlaneseq
    %v166 = vshrl.u32 %v165, 7
    %v167 = vsub.s32 6, %v166
    %v168 = vrot.slane %v139, %v167
    %v169 = vlaneseq
    %v170 = vshrl.u32 %v169, 7
    %v171 = vsub.s32 7, %v170
    %v172 = vrot.slane %v139, %v171
    %v245 = vunpack.c.l.b16 %v75
    %v246 = vunpack.c.h.b16 %v75
    %v247 = vunpack.c.l.b16 %v76
    %v248 = vunpack.c.h.b16 %v76
    %v249 = vunpack.c.l.b16 %v77
    %v250 = vunpack.c.h.b16 %v77
    %v251 = vunpack.c.l.b16 %v78
    %v252 = vunpack.c.h.b16 %v78
    %v253 = vunpack.c.l.b16 %v79
    %v254 = vunpack.c.h.b16 %v79
    %v255 = vunpack.c.l.b16 %v80
    %v256 = vunpack.c.h.b16 %v80
    %v257 = vunpack.c.l.b16 %v81
    %v258 = vunpack.c.h.b16 %v81
    %v259 = vunpack.c.l.b16 %v82
    %v260 = vunpack.c.h.b16 %v82
    %v261 = vunpack.c.l.b16 %v83
    %v262 = vunpack.c.h.b16 %v83
    %v263 = vunpack.c.l.b16 %v84
    %v264 = vunpack.c.h.b16 %v84
    %v265 = vunpack.c.l.b16 %v85
    %v266 = vunpack.c.h.b16 %v85
    %v267 = vunpack.c.l.b16 %v86
    %v268 = vunpack.c.h.b16 %v86
    %v269 = vunpack.c.l.b16 %v87
    %v270 = vunpack.c.h.b16 %v87
    %v271 = vunpack.c.l.b16 %v88
    %v272 = vunpack.c.h.b16 %v88
    %v273 = vunpack.c.l.b16 %v89
    %v274 = vunpack.c.h.b16 %v89
    %v275 = vunpack.c.l.b16 %v90
    %v276 = vunpack.c.h.b16 %v90
    %v277 = vunpack.c.l.b16 %v91
    %v278 = vunpack.c.h.b16 %v91
    %v279 = vunpack.c.l.b16 %v92
    %v280 = vunpack.c.h.b16 %v92
    %v281 = vunpack.c.l.b16 %v93
    %v282 = vunpack.c.h.b16 %v93
    %v283 = vunpack.c.l.b16 %v94
    %v284 = vunpack.c.h.b16 %v94
    %v285 = vunpack.c.l.b16 %v95
    %v286 = vunpack.c.h.b16 %v95
    %v287 = vunpack.c.l.b16 %v96
    %v288 = vunpack.c.h.b16 %v96
    %v289 = vunpack.c.l.b16 %v97
    %v290 = vunpack.c.h.b16 %v97
    %v291 = vunpack.c.l.b16 %v98
    %v292 = vunpack.c.h.b16 %v98
    %v293 = vunpack.c.l.b16 %v99
    %v294 = vunpack.c.h.b16 %v99
    %v295 = vunpack.c.l.b16 %v100
    %v296 = vunpack.c.h.b16 %v100
    %v297 = vunpack.c.l.b16 %v101
    %v298 = vunpack.c.h.b16 %v101
    %v299 = vunpack.c.l.b16 %v102
    %v300 = vunpack.c.h.b16 %v102
    %v301 = vunpack.c.l.b16 %v103
    %v302 = vunpack.c.h.b16 %v103
    %v303 = vunpack.c.l.b16 %v104
    %v304 = vunpack.c.h.b16 %v104
    %v305 = vunpack.c.l.b16 %v105
    %v306 = vunpack.c.h.b16 %v105
    %v307 = vunpack.c.l.b16 %v106
    %v308 = vunpack.c.h.b16 %v106
    %v309 = vunpack.c.l.b16 %v107
    %v310 = vunpack.c.h.b16 %v107
    %v311 = vunpack.c.l.b16 %v108
    %v312 = vunpack.c.h.b16 %v108
    %v313 = vunpack.c.l.b16 %v109
    %v314 = vunpack.c.h.b16 %v109
    %v315 = vunpack.c.l.b16 %v110
    %v316 = vunpack.c.h.b16 %v110
    %v317 = vunpack.c.l.b16 %v111
    %v318 = vunpack.c.h.b16 %v111
    %v319 = vunpack.c.l.b16 %v112
    %v320 = vunpack.c.h.b16 %v112
    %v321 = vunpack.c.l.b16 %v113
    %v322 = vunpack.c.h.b16 %v113
    %v323 = vunpack.c.l.b16 %v114
    %v324 = vunpack.c.h.b16 %v114
    %v325 = vunpack.c.l.b16 %v115
    %v326 = vunpack.c.h.b16 %v115
    %v327 = vunpack.c.l.b16 %v116
    %v328 = vunpack.c.h.b16 %v116
    %v329 = vunpack.c.l.b16 %v117
    %v330 = vunpack.c.h.b16 %v117
    %v331 = vunpack.c.l.b16 %v118
    %v332 = vunpack.c.h.b16 %v118
    %v333 = vunpack.c.l.b16 %v119
    %v334 = vunpack.c.h.b16 %v119
    %v335 = vunpack.c.l.b16 %v120
    %v336 = vunpack.c.h.b16 %v120
    %v337 = vunpack.c.l.b16 %v121
    %v338 = vunpack.c.h.b16 %v121
    %v339 = vunpack.c.l.b16 %v122
    %v340 = vunpack.c.h.b16 %v122
    %v341 = vunpack.c.l.b16 %v123
    %v342 = vunpack.c.h.b16 %v123
    %v343 = vunpack.c.l.b16 %v124
    %v344 = vunpack.c.h.b16 %v124
    %v345 = vunpack.c.l.b16 %v125
    %v346 = vunpack.c.h.b16 %v125
    %v347 = vunpack.c.l.b16 %v126
    %v348 = vunpack.c.h.b16 %v126
    %v349 = vunpack.c.l.b16 %v127
    %v350 = vunpack.c.h.b16 %v127
    %v351 = vunpack.c.l.b16 %v128
    %v352 = vunpack.c.h.b16 %v128
    %v353 = vunpack.c.l.b16 %v129
    %v354 = vunpack.c.h.b16 %v129
    %v355 = vunpack.c.l.b16 %v130
    %v356 = vunpack.c.h.b16 %v130
    %v357 = vunpack.c.l.b16 %v131
    %v358 = vunpack.c.h.b16 %v131
    %v359 = vunpack.c.l.b16 %v132
    %v360 = vunpack.c.h.b16 %v132
    %v361 = vunpack.c.l.b16 %v133
    %v362 = vunpack.c.h.b16 %v133
    %v363 = vunpack.c.l.b16 %v134
    %v364 = vunpack.c.h.b16 %v134
    %v365 = vunpack.c.l.b16 %v135
    %v366 = vunpack.c.h.b16 %v135
    %v367 = vunpack.c.l.b16 %v136
    %v368 = vunpack.c.h.b16 %v136
    %v369 = vunpack.c.l.b16 %v137
    %v370 = vunpack.c.h.b16 %v137
    %v371 = vunpack.c.l.b16 %v138
    %v372 = vunpack.c.h.b16 %v138
    %v373 = vpack.c.b16 %v253, %v245
    %v374 = vpack.c.b16 %v254, %v246
    %v375 = vpack.c.b16 %v255, %v247
    %v376 = vpack.c.b16 %v256, %v248
    %v377 = vpack.c.b16 %v257, %v249
    %v378 = vpack.c.b16 %v258, %v250
    %v379 = vpack.c.b16 %v259, %v251
    %v380 = vpack.c.b16 %v260, %v252
    %v381 = vpack.c.b16 %v269, %v261
    %v382 = vpack.c.b16 %v270, %v262
    %v383 = vpack.c.b16 %v271, %v263
    %v384 = vpack.c.b16 %v272, %v264
    %v385 = vpack.c.b16 %v273, %v265
    %v386 = vpack.c.b16 %v274, %v266
    %v387 = vpack.c.b16 %v275, %v267
    %v388 = vpack.c.b16 %v276, %v268
    %v389 = vpack.c.b16 %v285, %v277
    %v390 = vpack.c.b16 %v286, %v278
    %v391 = vpack.c.b16 %v287, %v279
    %v392 = vpack.c.b16 %v288, %v280
    %v393 = vpack.c.b16 %v289, %v281
    %v394 = vpack.c.b16 %v290, %v282
    %v395 = vpack.c.b16 %v291, %v283
    %v396 = vpack.c.b16 %v292, %v284
    %v397 = vpack.c.b16 %v301, %v293
    %v398 = vpack.c.b16 %v302, %v294
    %v399 = vpack.c.b16 %v303, %v295
    %v400 = vpack.c.b16 %v304, %v296
    %v401 = vpack.c.b16 %v305, %v297
    %v402 = vpack.c.b16 %v306, %v298
    %v403 = vpack.c.b16 %v307, %v299
    %v404 = vpack.c.b16 %v308, %v300
    %v405 = vpack.c.b16 %v317, %v309
    %v406 = vpack.c.b16 %v318, %v310
    %v407 = vpack.c.b16 %v319, %v311
    %v408 = vpack.c.b16 %v320, %v312
    %v409 = vpack.c.b16 %v321, %v313
    %v410 = vpack.c.b16 %v322, %v314
    %v411 = vpack.c.b16 %v323, %v315
    %v412 = vpack.c.b16 %v324, %v316
    %v413 = vpack.c.b16 %v333, %v325
    %v414 = vpack.c.b16 %v334, %v326
    %v415 = vpack.c.b16 %v335, %v327
    %v416 = vpack.c.b16 %v336, %v328
    %v417 = vpack.c.b16 %v337, %v329
    %v418 = vpack.c.b16 %v338, %v330
    %v419 = vpack.c.b16 %v339, %v331
    %v420 = vpack.c.b16 %v340, %v332
    %v421 = vpack.c.b16 %v349, %v341
    %v422 = vpack.c.b16 %v350, %v342
    %v423 = vpack.c.b16 %v351, %v343
    %v424 = vpack.c.b16 %v352, %v344
    %v425 = vpack.c.b16 %v353, %v345
    %v426 = vpack.c.b16 %v354, %v346
    %v427 = vpack.c.b16 %v355, %v347
    %v428 = vpack.c.b16 %v356, %v348
    %v429 = vpack.c.b16 %v365, %v357
    %v430 = vpack.c.b16 %v366, %v358
    %v431 = vpack.c.b16 %v367, %v359
    %v432 = vpack.c.b16 %v368, %v360
    %v433 = vpack.c.b16 %v369, %v361
    %v434 = vpack.c.b16 %v370, %v362
    %v435 = vpack.c.b16 %v371, %v363
    %v436 = vpack.c.b16 %v372, %v364
    %501 = vmatprep.subr.bf16.mxu0 %v430
    %502 = vmatpush1.bf16.msra.mxu0 %v429
    %503 = vmatprep.subr.bf16.mxu0 %v422
    %504 = vmatpush1.bf16.msra.mxu0 %v421
    %505 = vmatprep.subr.bf16.mxu0 %v414
    %506 = vmatpush1.bf16.msra.mxu0 %v413
    %507 = vmatprep.subr.bf16.mxu0 %v406
    %508 = vmatpush1.bf16.msra.mxu0 %v405
    %509 = vmatprep.subr.bf16.mxu0 %v398
    %510 = vmatpush1.bf16.msra.mxu0 %v397
    %511 = vmatprep.subr.bf16.mxu0 %v390
    %512 = vmatpush1.bf16.msra.mxu0 %v389
    %513 = vmatprep.subr.bf16.mxu0 %v382
    %514 = vmatpush1.bf16.msra.mxu0 %v381
    %515 = vmatprep.subr.bf16.mxu0 %v374
    %516 = vmatpush1.bf16.msra.mxu0 %v373
    %517 = vmatprep.subr.bf16.mxu0 0
    %518 = vmatpush2.bf16.msra.mxu0 0
    %519 = vmatprep.subr.bf16.mxu0 0
    %520 = vmatpush2.bf16.msra.mxu0 0
    %521 = vmatprep.subr.bf16.mxu0 0
    %522 = vmatpush2.bf16.msra.mxu0 0
    %523 = vmatprep.subr.bf16.mxu0 0
    %524 = vmatpush2.bf16.msra.mxu0 0
    %525 = vmatprep.subr.bf16.mxu0 0
    %526 = vmatpush2.bf16.msra.mxu0 0
    %527 = vmatprep.subr.bf16.mxu0 0
    %528 = vmatpush2.bf16.msra.mxu0 0
    %529 = vmatprep.subr.bf16.mxu0 0
    %530 = vmatpush2.bf16.msra.mxu0 0
    %531 = vmatprep.subr.bf16.mxu0 0
    %532 = vmatpush2.bf16.msra.mxu0 0
    %533 = vmatprep.mubr.bf16.mxu0 0
    %534 = vmatmul.mubr.bf16.gmra.mxu0 %v74
    %v535 = vpop.f32.mrf.mxu0
    %v536 = vadd.f32 %v144, %v535
    %v537 = vpop.f32.mrf.mxu0
    %v538 = vadd.f32 %v148, %v537
    %v539 = vpop.f32.mrf.mxu0
    %v540 = vpop.f32.mrf.mxu0
    %541 = vdwg.mxu0
    %542 = vmatprep.subr.bf16.mxu0 %v432
    %543 = vmatpush1.bf16.msra.mxu0 %v431
    %544 = vmatprep.subr.bf16.mxu0 %v424
    %545 = vmatpush1.bf16.msra.mxu0 %v423
    %546 = vmatprep.subr.bf16.mxu0 %v416
    %547 = vmatpush1.bf16.msra.mxu0 %v415
    %548 = vmatprep.subr.bf16.mxu0 %v408
    %549 = vmatpush1.bf16.msra.mxu0 %v407
    %550 = vmatprep.subr.bf16.mxu0 %v400
    %551 = vmatpush1.bf16.msra.mxu0 %v399
    %552 = vmatprep.subr.bf16.mxu0 %v392
    %553 = vmatpush1.bf16.msra.mxu0 %v391
    %554 = vmatprep.subr.bf16.mxu0 %v384
    %555 = vmatpush1.bf16.msra.mxu0 %v383
    %556 = vmatprep.subr.bf16.mxu0 %v376
    %557 = vmatpush1.bf16.msra.mxu0 %v375
    %558 = vmatprep.subr.bf16.mxu0 0
    %559 = vmatpush2.bf16.msra.mxu0 0
    %560 = vmatprep.subr.bf16.mxu0 0
    %561 = vmatpush2.bf16.msra.mxu0 0
    %562 = vmatprep.subr.bf16.mxu0 0
    %563 = vmatpush2.bf16.msra.mxu0 0
    %564 = vmatprep.subr.bf16.mxu0 0
    %565 = vmatpush2.bf16.msra.mxu0 0
    %566 = vmatprep.subr.bf16.mxu0 0
    %567 = vmatpush2.bf16.msra.mxu0 0
    %568 = vmatprep.subr.bf16.mxu0 0
    %569 = vmatpush2.bf16.msra.mxu0 0
    %570 = vmatprep.subr.bf16.mxu0 0
    %571 = vmatpush2.bf16.msra.mxu0 0
    %572 = vmatprep.subr.bf16.mxu0 0
    %573 = vmatpush2.bf16.msra.mxu0 0
    %574 = vmatprep.mubr.bf16.mxu0 0
    %575 = vmatmul.mubr.bf16.gmra.mxu0 %v74
    %v576 = vpop.f32.mrf.mxu0
    %v577 = vadd.f32 %v152, %v576
    %v578 = vpop.f32.mrf.mxu0
    %v579 = vadd.f32 %v156, %v578
    %v580 = vpop.f32.mrf.mxu0
    %v581 = vpop.f32.mrf.mxu0
    %582 = vdwg.mxu0
    %583 = vmatprep.subr.bf16.mxu0 %v434
    %584 = vmatpush1.bf16.msra.mxu0 %v433
    %585 = vmatprep.subr.bf16.mxu0 %v426
    %586 = vmatpush1.bf16.msra.mxu0 %v425
    %587 = vmatprep.subr.bf16.mxu0 %v418
    %588 = vmatpush1.bf16.msra.mxu0 %v417
    %589 = vmatprep.subr.bf16.mxu0 %v410
    %590 = vmatpush1.bf16.msra.mxu0 %v409
    %591 = vmatprep.subr.bf16.mxu0 %v402
    %592 = vmatpush1.bf16.msra.mxu0 %v401
    %593 = vmatprep.subr.bf16.mxu0 %v394
    %594 = vmatpush1.bf16.msra.mxu0 %v393
    %595 = vmatprep.subr.bf16.mxu0 %v386
    %596 = vmatpush1.bf16.msra.mxu0 %v385
    %597 = vmatprep.subr.bf16.mxu0 %v378
    %598 = vmatpush1.bf16.msra.mxu0 %v377
    %599 = vmatprep.subr.bf16.mxu0 0
    %600 = vmatpush2.bf16.msra.mxu0 0
    %601 = vmatprep.subr.bf16.mxu0 0
    %602 = vmatpush2.bf16.msra.mxu0 0
    %603 = vmatprep.subr.bf16.mxu0 0
    %604 = vmatpush2.bf16.msra.mxu0 0
    %605 = vmatprep.subr.bf16.mxu0 0
    %606 = vmatpush2.bf16.msra.mxu0 0
    %607 = vmatprep.subr.bf16.mxu0 0
    %608 = vmatpush2.bf16.msra.mxu0 0
    %609 = vmatprep.subr.bf16.mxu0 0
    %610 = vmatpush2.bf16.msra.mxu0 0
    %611 = vmatprep.subr.bf16.mxu0 0
    %612 = vmatpush2.bf16.msra.mxu0 0
    %613 = vmatprep.subr.bf16.mxu0 0
    %614 = vmatpush2.bf16.msra.mxu0 0
    %615 = vmatprep.mubr.bf16.mxu0 0
    %616 = vmatmul.mubr.bf16.gmra.mxu0 %v74
    %v617 = vpop.f32.mrf.mxu0
    %v618 = vadd.f32 %v160, %v617
    %v619 = vpop.f32.mrf.mxu0
    %v620 = vadd.f32 %v164, %v619
    %v621 = vpop.f32.mrf.mxu0
    %v622 = vpop.f32.mrf.mxu0
    %623 = vdwg.mxu0
    %624 = vmatprep.subr.bf16.mxu0 %v436
    %625 = vmatpush1.bf16.msra.mxu0 %v435
    %626 = vmatprep.subr.bf16.mxu0 %v428
    %627 = vmatpush1.bf16.msra.mxu0 %v427
    %628 = vmatprep.subr.bf16.mxu0 %v420
    %629 = vmatpush1.bf16.msra.mxu0 %v419
    %630 = vmatprep.subr.bf16.mxu0 %v412
    %631 = vmatpush1.bf16.msra.mxu0 %v411
    %632 = vmatprep.subr.bf16.mxu0 %v404
    %633 = vmatpush1.bf16.msra.mxu0 %v403
    %634 = vmatprep.subr.bf16.mxu0 %v396
    %635 = vmatpush1.bf16.msra.mxu0 %v395
    %636 = vmatprep.subr.bf16.mxu0 %v388
    %637 = vmatpush1.bf16.msra.mxu0 %v387
    %638 = vmatprep.subr.bf16.mxu0 %v380
    %639 = vmatpush1.bf16.msra.mxu0 %v379
    %640 = vmatprep.subr.bf16.mxu0 0
    %641 = vmatpush2.bf16.msra.mxu0 0
    %642 = vmatprep.subr.bf16.mxu0 0
    %643 = vmatpush2.bf16.msra.mxu0 0
    %644 = vmatprep.subr.bf16.mxu0 0
    %645 = vmatpush2.bf16.msra.mxu0 0
    %646 = vmatprep.subr.bf16.mxu0 0
    %647 = vmatpush2.bf16.msra.mxu0 0
    %648 = vmatprep.subr.bf16.mxu0 0
    %649 = vmatpush2.bf16.msra.mxu0 0
    %650 = vmatprep.subr.bf16.mxu0 0
    %651 = vmatpush2.bf16.msra.mxu0 0
    %652 = vmatprep.subr.bf16.mxu0 0
    %653 = vmatpush2.bf16.msra.mxu0 0
    %654 = vmatprep.subr.bf16.mxu0 0
    %655 = vmatpush2.bf16.msra.mxu0 0
    %656 = vmatprep.mubr.bf16.mxu0 0
    %657 = vmatmul.mubr.bf16.gmra.mxu0 %v74
    %v658 = vpop.f32.mrf.mxu0
    %v659 = vadd.f32 %v168, %v658
    %v660 = vpop.f32.mrf.mxu0
    %v661 = vadd.f32 %v172, %v660
    %v662 = vpop.f32.mrf.mxu0
    %v663 = vpop.f32.mrf.mxu0
    %664 = vdwg.mxu0
    %v665 = vmax.f32 %v536, 0.0
    %v666 = vmax.f32 %v538, 0.0
    %v667 = vmax.f32 %v577, 0.0
    %v668 = vmax.f32 %v579, 0.0
    %v669 = vmax.f32 %v618, 0.0
    %v670 = vmax.f32 %v620, 0.0
    %v671 = vmax.f32 %v659, 0.0
    %v672 = vmax.f32 %v661, 0.0
    %v673 = vpack.c.bf16 %v665, %v665
    %v674 = vpack.c.bf16 %v666, %v666
    %v675 = vpack.c.bf16 %v667, %v667
    %v676 = vpack.c.bf16 %v668, %v668
    %v677 = vpack.c.bf16 %v669, %v669
    %v678 = vpack.c.bf16 %v670, %v670
    %v679 = vpack.c.bf16 %v671, %v671
    %v680 = vpack.c.bf16 %v672, %v672
    %v681 = vld [vmem:[#allocation8] sm:$0xff]
    %v682 = vld [vmem:[#allocation8 + $0x8] sm:$0xff]
    %v683 = vld [vmem:[#allocation8 + $0x10] sm:$0xff]
    %v684 = vld [vmem:[#allocation8 + $0x18] sm:$0xff]
    %v685 = vld [vmem:[#allocation8 + $0x20] sm:$0xff]
    %v686 = vld [vmem:[#allocation8 + $0x28] sm:$0xff]
    %v687 = vld [vmem:[#allocation8 + $0x30] sm:$0xff]
    %v688 = vld [vmem:[#allocation8 + $0x38] sm:$0xff]
    %v689 = vld [vmem:[#allocation8 + $0x40] sm:$0xff]
    %v690 = vld [vmem:[#allocation8 + $0x48] sm:$0xff]
    %v691 = vld [vmem:[#allocation8 + $0x50] sm:$0xff]
    %v692 = vld [vmem:[#allocation8 + $0x58] sm:$0xff]
    %v693 = vld [vmem:[#allocation8 + $0x60] sm:$0xff]
    %v694 = vld [vmem:[#allocation8 + $0x68] sm:$0xff]
    %v695 = vld [vmem:[#allocation8 + $0x70] sm:$0xff]
    %v696 = vld [vmem:[#allocation8 + $0x78] sm:$0xff]
    %v697 = vld [vmem:[#allocation8 + $0x80] sm:$0xff]
    %v698 = vld [vmem:[#allocation8 + $0x88] sm:$0xff]
    %v699 = vld [vmem:[#allocation8 + $0x90] sm:$0xff]
    %v700 = vld [vmem:[#allocation8 + $0x98] sm:$0xff]
    %v701 = vld [vmem:[#allocation8 + $0xa0] sm:$0xff]
    %v702 = vld [vmem:[#allocation8 + $0xa8] sm:$0xff]
    %v703 = vld [vmem:[#allocation8 + $0xb0] sm:$0xff]
    %v704 = vld [vmem:[#allocation8 + $0xb8] sm:$0xff]
    %v705 = vld [vmem:[#allocation8 + $0xc0] sm:$0xff]
    %v706 = vld [vmem:[#allocation8 + $0xc8] sm:$0xff]
    %v707 = vld [vmem:[#allocation8 + $0xd0] sm:$0xff]
    %v708 = vld [vmem:[#allocation8 + $0xd8] sm:$0xff]
    %v709 = vld [vmem:[#allocation8 + $0xe0] sm:$0xff]
    %v710 = vld [vmem:[#allocation8 + $0xe8] sm:$0xff]
    %v711 = vld [vmem:[#allocation8 + $0xf0] sm:$0xff]
    %v712 = vld [vmem:[#allocation8 + $0xf8] sm:$0xff]
    %v713 = vld [vmem:[#allocation8 + $0x100] sm:$0xff]
    %v714 = vld [vmem:[#allocation8 + $0x108] sm:$0xff]
    %v715 = vld [vmem:[#allocation8 + $0x110] sm:$0xff]
    %v716 = vld [vmem:[#allocation8 + $0x118] sm:$0xff]
    %v717 = vld [vmem:[#allocation8 + $0x120] sm:$0xff]
    %v718 = vld [vmem:[#allocation8 + $0x128] sm:$0xff]
    %v719 = vld [vmem:[#allocation8 + $0x130] sm:$0xff]
    %v720 = vld [vmem:[#allocation8 + $0x138] sm:$0xff]
    %v721 = vld [vmem:[#allocation8 + $0x140] sm:$0xff]
    %v722 = vld [vmem:[#allocation8 + $0x148] sm:$0xff]
    %v723 = vld [vmem:[#allocation8 + $0x150] sm:$0xff]
    %v724 = vld [vmem:[#allocation8 + $0x158] sm:$0xff]
    %v725 = vld [vmem:[#allocation8 + $0x160] sm:$0xff]
    %v726 = vld [vmem:[#allocation8 + $0x168] sm:$0xff]
    %v727 = vld [vmem:[#allocation8 + $0x170] sm:$0xff]
    %v728 = vld [vmem:[#allocation8 + $0x178] sm:$0xff]
    %v729 = vld [vmem:[#allocation8 + $0x180] sm:$0xff]
    %v730 = vld [vmem:[#allocation8 + $0x188] sm:$0xff]
    %v731 = vld [vmem:[#allocation8 + $0x190] sm:$0xff]
    %v732 = vld [vmem:[#allocation8 + $0x198] sm:$0xff]
    %v733 = vld [vmem:[#allocation8 + $0x1a0] sm:$0xff]
    %v734 = vld [vmem:[#allocation8 + $0x1a8] sm:$0xff]
    %v735 = vld [vmem:[#allocation8 + $0x1b0] sm:$0xff]
    %v736 = vld [vmem:[#allocation8 + $0x1b8] sm:$0xff]
    %v737 = vld [vmem:[#allocation8 + $0x1c0] sm:$0xff]
    %v738 = vld [vmem:[#allocation8 + $0x1c8] sm:$0xff]
    %v739 = vld [vmem:[#allocation8 + $0x1d0] sm:$0xff]
    %v740 = vld [vmem:[#allocation8 + $0x1d8] sm:$0xff]
    %v741 = vld [vmem:[#allocation8 + $0x1e0] sm:$0xff]
    %v742 = vld [vmem:[#allocation8 + $0x1e8] sm:$0xff]
    %v743 = vld [vmem:[#allocation8 + $0x1f0] sm:$0xff]
    %v744 = vld [vmem:[#allocation8 + $0x1f8] sm:$0xff]
    %v745 = vld [vmem:[#allocation8 + $0x200] sm:$0xff]
    %v746 = vld [vmem:[#allocation8 + $0x208] sm:$0xff]
    %v747 = vld [vmem:[#allocation8 + $0x210] sm:$0xff]
    %v748 = vld [vmem:[#allocation8 + $0x218] sm:$0xff]
    %v749 = vld [vmem:[#allocation8 + $0x220] sm:$0xff]
    %v750 = vld [vmem:[#allocation8 + $0x228] sm:$0xff]
    %v751 = vld [vmem:[#allocation8 + $0x230] sm:$0xff]
    %v752 = vld [vmem:[#allocation8 + $0x238] sm:$0xff]
    %v753 = vld [vmem:[#allocation8 + $0x240] sm:$0xff]
    %v754 = vld [vmem:[#allocation8 + $0x248] sm:$0xff]
    %v755 = vld [vmem:[#allocation8 + $0x250] sm:$0xff]
    %v756 = vld [vmem:[#allocation8 + $0x258] sm:$0xff]
    %v757 = vld [vmem:[#allocation8 + $0x260] sm:$0xff]
    %v758 = vld [vmem:[#allocation8 + $0x268] sm:$0xff]
    %v759 = vld [vmem:[#allocation8 + $0x270] sm:$0xff]
    %v760 = vld [vmem:[#allocation8 + $0x278] sm:$0xff]
    %v761 = vld [vmem:[#allocation8 + $0x280] sm:$0xff]
    %v762 = vld [vmem:[#allocation8 + $0x288] sm:$0xff]
    %v763 = vld [vmem:[#allocation8 + $0x290] sm:$0xff]
    %v764 = vld [vmem:[#allocation8 + $0x298] sm:$0xff]
    %v765 = vld [vmem:[#allocation8 + $0x2a0] sm:$0xff]
    %v766 = vld [vmem:[#allocation8 + $0x2a8] sm:$0xff]
    %v767 = vld [vmem:[#allocation8 + $0x2b0] sm:$0xff]
    %v768 = vld [vmem:[#allocation8 + $0x2b8] sm:$0xff]
    %v769 = vld [vmem:[#allocation8 + $0x2c0] sm:$0xff]
    %v770 = vld [vmem:[#allocation8 + $0x2c8] sm:$0xff]
    %v771 = vld [vmem:[#allocation8 + $0x2d0] sm:$0xff]
    %v772 = vld [vmem:[#allocation8 + $0x2d8] sm:$0xff]
    %v773 = vld [vmem:[#allocation8 + $0x2e0] sm:$0xff]
    %v774 = vld [vmem:[#allocation8 + $0x2e8] sm:$0xff]
    %v775 = vld [vmem:[#allocation8 + $0x2f0] sm:$0xff]
    %v776 = vld [vmem:[#allocation8 + $0x2f8] sm:$0xff]
    %v777 = vld [vmem:[#allocation8 + $0x300] sm:$0xff]
    %v778 = vld [vmem:[#allocation8 + $0x308] sm:$0xff]
    %v779 = vld [vmem:[#allocation8 + $0x310] sm:$0xff]
    %v780 = vld [vmem:[#allocation8 + $0x318] sm:$0xff]
    %v781 = vld [vmem:[#allocation8 + $0x320] sm:$0xff]
    %v782 = vld [vmem:[#allocation8 + $0x328] sm:$0xff]
    %v783 = vld [vmem:[#allocation8 + $0x330] sm:$0xff]
    %v784 = vld [vmem:[#allocation8 + $0x338] sm:$0xff]
    %v785 = vld [vmem:[#allocation8 + $0x340] sm:$0xff]
    %v786 = vld [vmem:[#allocation8 + $0x348] sm:$0xff]
    %v787 = vld [vmem:[#allocation8 + $0x350] sm:$0xff]
    %v788 = vld [vmem:[#allocation8 + $0x358] sm:$0xff]
    %v789 = vld [vmem:[#allocation8 + $0x360] sm:$0xff]
    %v790 = vld [vmem:[#allocation8 + $0x368] sm:$0xff]
    %v791 = vld [vmem:[#allocation8 + $0x370] sm:$0xff]
    %v792 = vld [vmem:[#allocation8 + $0x378] sm:$0xff]
    %v793 = vld [vmem:[#allocation8 + $0x380] sm:$0xff]
    %v794 = vld [vmem:[#allocation8 + $0x388] sm:$0xff]
    %v795 = vld [vmem:[#allocation8 + $0x390] sm:$0xff]
    %v796 = vld [vmem:[#allocation8 + $0x398] sm:$0xff]
    %v797 = vld [vmem:[#allocation8 + $0x3a0] sm:$0xff]
    %v798 = vld [vmem:[#allocation8 + $0x3a8] sm:$0xff]
    %v799 = vld [vmem:[#allocation8 + $0x3b0] sm:$0xff]
    %v800 = vld [vmem:[#allocation8 + $0x3b8] sm:$0xff]
    %v801 = vld [vmem:[#allocation8 + $0x3c0] sm:$0xff]
    %v802 = vld [vmem:[#allocation8 + $0x3c8] sm:$0xff]
    %v803 = vld [vmem:[#allocation8 + $0x3d0] sm:$0xff]
    %v804 = vld [vmem:[#allocation8 + $0x3d8] sm:$0xff]
    %v805 = vld [vmem:[#allocation8 + $0x3e0] sm:$0xff]
    %v806 = vld [vmem:[#allocation8 + $0x3e8] sm:$0xff]
    %v807 = vld [vmem:[#allocation8 + $0x3f0] sm:$0xff]
    %v808 = vld [vmem:[#allocation8 + $0x3f8] sm:$0xff]
    %v809 = vld [vmem:[#allocation8 + $0x400] sm:$0xff]
    %v810 = vld [vmem:[#allocation8 + $0x408] sm:$0xff]
    %v811 = vld [vmem:[#allocation8 + $0x410] sm:$0xff]
    %v812 = vld [vmem:[#allocation8 + $0x418] sm:$0xff]
    %v813 = vld [vmem:[#allocation8 + $0x420] sm:$0xff]
    %v814 = vld [vmem:[#allocation8 + $0x428] sm:$0xff]
    %v815 = vld [vmem:[#allocation8 + $0x430] sm:$0xff]
    %v816 = vld [vmem:[#allocation8 + $0x438] sm:$0xff]
    %v817 = vld [vmem:[#allocation8 + $0x440] sm:$0xff]
    %v818 = vld [vmem:[#allocation8 + $0x448] sm:$0xff]
    %v819 = vld [vmem:[#allocation8 + $0x450] sm:$0xff]
    %v820 = vld [vmem:[#allocation8 + $0x458] sm:$0xff]
    %v821 = vld [vmem:[#allocation8 + $0x460] sm:$0xff]
    %v822 = vld [vmem:[#allocation8 + $0x468] sm:$0xff]
    %v823 = vld [vmem:[#allocation8 + $0x470] sm:$0xff]
    %v824 = vld [vmem:[#allocation8 + $0x478] sm:$0xff]
    %v825 = vld [vmem:[#allocation8 + $0x480] sm:$0xff]
    %v826 = vld [vmem:[#allocation8 + $0x488] sm:$0xff]
    %v827 = vld [vmem:[#allocation8 + $0x490] sm:$0xff]
    %v828 = vld [vmem:[#allocation8 + $0x498] sm:$0xff]
    %v829 = vld [vmem:[#allocation8 + $0x4a0] sm:$0xff]
    %v830 = vld [vmem:[#allocation8 + $0x4a8] sm:$0xff]
    %v831 = vld [vmem:[#allocation8 + $0x4b0] sm:$0xff]
    %v832 = vld [vmem:[#allocation8 + $0x4b8] sm:$0xff]
    %v833 = vld [vmem:[#allocation8 + $0x4c0] sm:$0xff]
    %v834 = vld [vmem:[#allocation8 + $0x4c8] sm:$0xff]
    %v835 = vld [vmem:[#allocation8 + $0x4d0] sm:$0xff]
    %v836 = vld [vmem:[#allocation8 + $0x4d8] sm:$0xff]
    %v837 = vld [vmem:[#allocation8 + $0x4e0] sm:$0xff]
    %v838 = vld [vmem:[#allocation8 + $0x4e8] sm:$0xff]
    %v839 = vld [vmem:[#allocation8 + $0x4f0] sm:$0xff]
    %v840 = vld [vmem:[#allocation8 + $0x4f8] sm:$0xff]
    %v841 = vld [vmem:[#allocation8 + $0x500] sm:$0xff]
    %v842 = vld [vmem:[#allocation8 + $0x508] sm:$0xff]
    %v843 = vld [vmem:[#allocation8 + $0x510] sm:$0xff]
    %v844 = vld [vmem:[#allocation8 + $0x518] sm:$0xff]
    %v845 = vld [vmem:[#allocation8 + $0x520] sm:$0xff]
    %v846 = vld [vmem:[#allocation8 + $0x528] sm:$0xff]
    %v847 = vld [vmem:[#allocation8 + $0x530] sm:$0xff]
    %v848 = vld [vmem:[#allocation8 + $0x538] sm:$0xff]
    %v849 = vld [vmem:[#allocation8 + $0x540] sm:$0xff]
    %v850 = vld [vmem:[#allocation8 + $0x548] sm:$0xff]
    %v851 = vld [vmem:[#allocation8 + $0x550] sm:$0xff]
    %v852 = vld [vmem:[#allocation8 + $0x558] sm:$0xff]
    %v853 = vld [vmem:[#allocation8 + $0x560] sm:$0xff]
    %v854 = vld [vmem:[#allocation8 + $0x568] sm:$0xff]
    %v855 = vld [vmem:[#allocation8 + $0x570] sm:$0xff]
    %v856 = vld [vmem:[#allocation8 + $0x578] sm:$0xff]
    %v857 = vld [vmem:[#allocation8 + $0x580] sm:$0xff]
    %v858 = vld [vmem:[#allocation8 + $0x588] sm:$0xff]
    %v859 = vld [vmem:[#allocation8 + $0x590] sm:$0xff]
    %v860 = vld [vmem:[#allocation8 + $0x598] sm:$0xff]
    %v861 = vld [vmem:[#allocation8 + $0x5a0] sm:$0xff]
    %v862 = vld [vmem:[#allocation8 + $0x5a8] sm:$0xff]
    %v863 = vld [vmem:[#allocation8 + $0x5b0] sm:$0xff]
    %v864 = vld [vmem:[#allocation8 + $0x5b8] sm:$0xff]
    %v865 = vld [vmem:[#allocation8 + $0x5c0] sm:$0xff]
    %v866 = vld [vmem:[#allocation8 + $0x5c8] sm:$0xff]
    %v867 = vld [vmem:[#allocation8 + $0x5d0] sm:$0xff]
    %v868 = vld [vmem:[#allocation8 + $0x5d8] sm:$0xff]
    %v869 = vld [vmem:[#allocation8 + $0x5e0] sm:$0xff]
    %v870 = vld [vmem:[#allocation8 + $0x5e8] sm:$0xff]
    %v871 = vld [vmem:[#allocation8 + $0x5f0] sm:$0xff]
    %v872 = vld [vmem:[#allocation8 + $0x5f8] sm:$0xff]
    %v873 = vld [vmem:[#allocation8 + $0x600] sm:$0xff]
    %v874 = vld [vmem:[#allocation8 + $0x608] sm:$0xff]
    %v875 = vld [vmem:[#allocation8 + $0x610] sm:$0xff]
    %v876 = vld [vmem:[#allocation8 + $0x618] sm:$0xff]
    %v877 = vld [vmem:[#allocation8 + $0x620] sm:$0xff]
    %v878 = vld [vmem:[#allocation8 + $0x628] sm:$0xff]
    %v879 = vld [vmem:[#allocation8 + $0x630] sm:$0xff]
    %v880 = vld [vmem:[#allocation8 + $0x638] sm:$0xff]
    %v881 = vld [vmem:[#allocation8 + $0x640] sm:$0xff]
    %v882 = vld [vmem:[#allocation8 + $0x648] sm:$0xff]
    %v883 = vld [vmem:[#allocation8 + $0x650] sm:$0xff]
    %v884 = vld [vmem:[#allocation8 + $0x658] sm:$0xff]
    %v885 = vld [vmem:[#allocation8 + $0x660] sm:$0xff]
    %v886 = vld [vmem:[#allocation8 + $0x668] sm:$0xff]
    %v887 = vld [vmem:[#allocation8 + $0x670] sm:$0xff]
    %v888 = vld [vmem:[#allocation8 + $0x678] sm:$0xff]
    %v889 = vld [vmem:[#allocation8 + $0x680] sm:$0xff]
    %v890 = vld [vmem:[#allocation8 + $0x688] sm:$0xff]
    %v891 = vld [vmem:[#allocation8 + $0x690] sm:$0xff]
    %v892 = vld [vmem:[#allocation8 + $0x698] sm:$0xff]
    %v893 = vld [vmem:[#allocation8 + $0x6a0] sm:$0xff]
    %v894 = vld [vmem:[#allocation8 + $0x6a8] sm:$0xff]
    %v895 = vld [vmem:[#allocation8 + $0x6b0] sm:$0xff]
    %v896 = vld [vmem:[#allocation8 + $0x6b8] sm:$0xff]
    %v897 = vld [vmem:[#allocation8 + $0x6c0] sm:$0xff]
    %v898 = vld [vmem:[#allocation8 + $0x6c8] sm:$0xff]
    %v899 = vld [vmem:[#allocation8 + $0x6d0] sm:$0xff]
    %v900 = vld [vmem:[#allocation8 + $0x6d8] sm:$0xff]
    %v901 = vld [vmem:[#allocation8 + $0x6e0] sm:$0xff]
    %v902 = vld [vmem:[#allocation8 + $0x6e8] sm:$0xff]
    %v903 = vld [vmem:[#allocation8 + $0x6f0] sm:$0xff]
    %v904 = vld [vmem:[#allocation8 + $0x6f8] sm:$0xff]
    %v905 = vld [vmem:[#allocation8 + $0x700] sm:$0xff]
    %v906 = vld [vmem:[#allocation8 + $0x708] sm:$0xff]
    %v907 = vld [vmem:[#allocation8 + $0x710] sm:$0xff]
    %v908 = vld [vmem:[#allocation8 + $0x718] sm:$0xff]
    %v909 = vld [vmem:[#allocation8 + $0x720] sm:$0xff]
    %v910 = vld [vmem:[#allocation8 + $0x728] sm:$0xff]
    %v911 = vld [vmem:[#allocation8 + $0x730] sm:$0xff]
    %v912 = vld [vmem:[#allocation8 + $0x738] sm:$0xff]
    %v913 = vld [vmem:[#allocation8 + $0x740] sm:$0xff]
    %v914 = vld [vmem:[#allocation8 + $0x748] sm:$0xff]
    %v915 = vld [vmem:[#allocation8 + $0x750] sm:$0xff]
    %v916 = vld [vmem:[#allocation8 + $0x758] sm:$0xff]
    %v917 = vld [vmem:[#allocation8 + $0x760] sm:$0xff]
    %v918 = vld [vmem:[#allocation8 + $0x768] sm:$0xff]
    %v919 = vld [vmem:[#allocation8 + $0x770] sm:$0xff]
    %v920 = vld [vmem:[#allocation8 + $0x778] sm:$0xff]
    %v921 = vld [vmem:[#allocation8 + $0x780] sm:$0xff]
    %v922 = vld [vmem:[#allocation8 + $0x788] sm:$0xff]
    %v923 = vld [vmem:[#allocation8 + $0x790] sm:$0xff]
    %v924 = vld [vmem:[#allocation8 + $0x798] sm:$0xff]
    %v925 = vld [vmem:[#allocation8 + $0x7a0] sm:$0xff]
    %v926 = vld [vmem:[#allocation8 + $0x7a8] sm:$0xff]
    %v927 = vld [vmem:[#allocation8 + $0x7b0] sm:$0xff]
    %v928 = vld [vmem:[#allocation8 + $0x7b8] sm:$0xff]
    %v929 = vld [vmem:[#allocation8 + $0x7c0] sm:$0xff]
    %v930 = vld [vmem:[#allocation8 + $0x7c8] sm:$0xff]
    %v931 = vld [vmem:[#allocation8 + $0x7d0] sm:$0xff]
    %v932 = vld [vmem:[#allocation8 + $0x7d8] sm:$0xff]
    %v933 = vld [vmem:[#allocation8 + $0x7e0] sm:$0xff]
    %v934 = vld [vmem:[#allocation8 + $0x7e8] sm:$0xff]
    %v935 = vld [vmem:[#allocation8 + $0x7f0] sm:$0xff]
    %v936 = vld [vmem:[#allocation8 + $0x7f8] sm:$0xff]
    %v937 = vld [vmem:[%s4] sm:$0xf]
    %v939 = vlaneseq
    %v940 = vshrl.u32 %v939, 7
    %v941 = vsub.s32 0, %v940
    %v942 = vrot.slane %v937, %v941
    %v943 = vlaneseq
    %v944 = vshrl.u32 %v943, 7
    %v945 = vsub.s32 1, %v944
    %v946 = vrot.slane %v937, %v945
    %v947 = vlaneseq
    %v948 = vshrl.u32 %v947, 7
    %v949 = vsub.s32 2, %v948
    %v950 = vrot.slane %v937, %v949
    %v951 = vlaneseq
    %v952 = vshrl.u32 %v951, 7
    %v953 = vsub.s32 3, %v952
    %v954 = vrot.slane %v937, %v953
    %v1215 = vunpack.c.l.b16 %v681
    %v1216 = vunpack.c.h.b16 %v681
    %v1217 = vunpack.c.l.b16 %v682
    %v1218 = vunpack.c.h.b16 %v682
    %v1219 = vunpack.c.l.b16 %v683
    %v1220 = vunpack.c.h.b16 %v683
    %v1221 = vunpack.c.l.b16 %v684
    %v1222 = vunpack.c.h.b16 %v684
    %v1223 = vunpack.c.l.b16 %v685
    %v1224 = vunpack.c.h.b16 %v685
    %v1225 = vunpack.c.l.b16 %v686
    %v1226 = vunpack.c.h.b16 %v686
    %v1227 = vunpack.c.l.b16 %v687
    %v1228 = vunpack.c.h.b16 %v687
    %v1229 = vunpack.c.l.b16 %v688
    %v1230 = vunpack.c.h.b16 %v688
    %v1231 = vunpack.c.l.b16 %v689
    %v1232 = vunpack.c.h.b16 %v689
    %v1233 = vunpack.c.l.b16 %v690
    %v1234 = vunpack.c.h.b16 %v690
    %v1235 = vunpack.c.l.b16 %v691
    %v1236 = vunpack.c.h.b16 %v691
    %v1237 = vunpack.c.l.b16 %v692
    %v1238 = vunpack.c.h.b16 %v692
    %v1239 = vunpack.c.l.b16 %v693
    %v1240 = vunpack.c.h.b16 %v693
    %v1241 = vunpack.c.l.b16 %v694
    %v1242 = vunpack.c.h.b16 %v694
    %v1243 = vunpack.c.l.b16 %v695
    %v1244 = vunpack.c.h.b16 %v695
    %v1245 = vunpack.c.l.b16 %v696
    %v1246 = vunpack.c.h.b16 %v696
    %v1247 = vunpack.c.l.b16 %v697
    %v1248 = vunpack.c.h.b16 %v697
    %v1249 = vunpack.c.l.b16 %v698
    %v1250 = vunpack.c.h.b16 %v698
    %v1251 = vunpack.c.l.b16 %v699
    %v1252 = vunpack.c.h.b16 %v699
    %v1253 = vunpack.c.l.b16 %v700
    %v1254 = vunpack.c.h.b16 %v700
    %v1255 = vunpack.c.l.b16 %v701
    %v1256 = vunpack.c.h.b16 %v701
    %v1257 = vunpack.c.l.b16 %v702
    %v1258 = vunpack.c.h.b16 %v702
    %v1259 = vunpack.c.l.b16 %v703
    %v1260 = vunpack.c.h.b16 %v703
    %v1261 = vunpack.c.l.b16 %v704
    %v1262 = vunpack.c.h.b16 %v704
    %v1263 = vunpack.c.l.b16 %v705
    %v1264 = vunpack.c.h.b16 %v705
    %v1265 = vunpack.c.l.b16 %v706
    %v1266 = vunpack.c.h.b16 %v706
    %v1267 = vunpack.c.l.b16 %v707
    %v1268 = vunpack.c.h.b16 %v707
    %v1269 = vunpack.c.l.b16 %v708
    %v1270 = vunpack.c.h.b16 %v708
    %v1271 = vunpack.c.l.b16 %v709
    %v1272 = vunpack.c.h.b16 %v709
    %v1273 = vunpack.c.l.b16 %v710
    %v1274 = vunpack.c.h.b16 %v710
    %v1275 = vunpack.c.l.b16 %v711
    %v1276 = vunpack.c.h.b16 %v711
    %v1277 = vunpack.c.l.b16 %v712
    %v1278 = vunpack.c.h.b16 %v712
    %v1279 = vunpack.c.l.b16 %v713
    %v1280 = vunpack.c.h.b16 %v713
    %v1281 = vunpack.c.l.b16 %v714
    %v1282 = vunpack.c.h.b16 %v714
    %v1283 = vunpack.c.l.b16 %v715
    %v1284 = vunpack.c.h.b16 %v715
    %v1285 = vunpack.c.l.b16 %v716
    %v1286 = vunpack.c.h.b16 %v716
    %v1287 = vunpack.c.l.b16 %v717
    %v1288 = vunpack.c.h.b16 %v717
    %v1289 = vunpack.c.l.b16 %v718
    %v1290 = vunpack.c.h.b16 %v718
    %v1291 = vunpack.c.l.b16 %v719
    %v1292 = vunpack.c.h.b16 %v719
    %v1293 = vunpack.c.l.b16 %v720
    %v1294 = vunpack.c.h.b16 %v720
    %v1295 = vunpack.c.l.b16 %v721
    %v1296 = vunpack.c.h.b16 %v721
    %v1297 = vunpack.c.l.b16 %v722
    %v1298 = vunpack.c.h.b16 %v722
    %v1299 = vunpack.c.l.b16 %v723
    %v1300 = vunpack.c.h.b16 %v723
    %v1301 = vunpack.c.l.b16 %v724
    %v1302 = vunpack.c.h.b16 %v724
    %v1303 = vunpack.c.l.b16 %v725
    %v1304 = vunpack.c.h.b16 %v725
    %v1305 = vunpack.c.l.b16 %v726
    %v1306 = vunpack.c.h.b16 %v726
    %v1307 = vunpack.c.l.b16 %v727
    %v1308 = vunpack.c.h.b16 %v727
    %v1309 = vunpack.c.l.b16 %v728
    %v1310 = vunpack.c.h.b16 %v728
    %v1311 = vunpack.c.l.b16 %v729
    %v1312 = vunpack.c.h.b16 %v729
    %v1313 = vunpack.c.l.b16 %v730
    %v1314 = vunpack.c.h.b16 %v730
    %v1315 = vunpack.c.l.b16 %v731
    %v1316 = vunpack.c.h.b16 %v731
    %v1317 = vunpack.c.l.b16 %v732
    %v1318 = vunpack.c.h.b16 %v732
    %v1319 = vunpack.c.l.b16 %v733
    %v1320 = vunpack.c.h.b16 %v733
    %v1321 = vunpack.c.l.b16 %v734
    %v1322 = vunpack.c.h.b16 %v734
    %v1323 = vunpack.c.l.b16 %v735
    %v1324 = vunpack.c.h.b16 %v735
    %v1325 = vunpack.c.l.b16 %v736
    %v1326 = vunpack.c.h.b16 %v736
    %v1327 = vunpack.c.l.b16 %v737
    %v1328 = vunpack.c.h.b16 %v737
    %v1329 = vunpack.c.l.b16 %v738
    %v1330 = vunpack.c.h.b16 %v738
    %v1331 = vunpack.c.l.b16 %v739
    %v1332 = vunpack.c.h.b16 %v739
    %v1333 = vunpack.c.l.b16 %v740
    %v1334 = vunpack.c.h.b16 %v740
    %v1335 = vunpack.c.l.b16 %v741
    %v1336 = vunpack.c.h.b16 %v741
    %v1337 = vunpack.c.l.b16 %v742
    %v1338 = vunpack.c.h.b16 %v742
    %v1339 = vunpack.c.l.b16 %v743
    %v1340 = vunpack.c.h.b16 %v743
    %v1341 = vunpack.c.l.b16 %v744
    %v1342 = vunpack.c.h.b16 %v744
    %v1343 = vunpack.c.l.b16 %v745
    %v1344 = vunpack.c.h.b16 %v745
    %v1345 = vunpack.c.l.b16 %v746
    %v1346 = vunpack.c.h.b16 %v746
    %v1347 = vunpack.c.l.b16 %v747
    %v1348 = vunpack.c.h.b16 %v747
    %v1349 = vunpack.c.l.b16 %v748
    %v1350 = vunpack.c.h.b16 %v748
    %v1351 = vunpack.c.l.b16 %v749
    %v1352 = vunpack.c.h.b16 %v749
    %v1353 = vunpack.c.l.b16 %v750
    %v1354 = vunpack.c.h.b16 %v750
    %v1355 = vunpack.c.l.b16 %v751
    %v1356 = vunpack.c.h.b16 %v751
    %v1357 = vunpack.c.l.b16 %v752
    %v1358 = vunpack.c.h.b16 %v752
    %v1359 = vunpack.c.l.b16 %v753
    %v1360 = vunpack.c.h.b16 %v753
    %v1361 = vunpack.c.l.b16 %v754
    %v1362 = vunpack.c.h.b16 %v754
    %v1363 = vunpack.c.l.b16 %v755
    %v1364 = vunpack.c.h.b16 %v755
    %v1365 = vunpack.c.l.b16 %v756
    %v1366 = vunpack.c.h.b16 %v756
    %v1367 = vunpack.c.l.b16 %v757
    %v1368 = vunpack.c.h.b16 %v757
    %v1369 = vunpack.c.l.b16 %v758
    %v1370 = vunpack.c.h.b16 %v758
    %v1371 = vunpack.c.l.b16 %v759
    %v1372 = vunpack.c.h.b16 %v759
    %v1373 = vunpack.c.l.b16 %v760
    %v1374 = vunpack.c.h.b16 %v760
    %v1375 = vunpack.c.l.b16 %v761
    %v1376 = vunpack.c.h.b16 %v761
    %v1377 = vunpack.c.l.b16 %v762
    %v1378 = vunpack.c.h.b16 %v762
    %v1379 = vunpack.c.l.b16 %v763
    %v1380 = vunpack.c.h.b16 %v763
    %v1381 = vunpack.c.l.b16 %v764
    %v1382 = vunpack.c.h.b16 %v764
    %v1383 = vunpack.c.l.b16 %v765
    %v1384 = vunpack.c.h.b16 %v765
    %v1385 = vunpack.c.l.b16 %v766
    %v1386 = vunpack.c.h.b16 %v766
    %v1387 = vunpack.c.l.b16 %v767
    %v1388 = vunpack.c.h.b16 %v767
    %v1389 = vunpack.c.l.b16 %v768
    %v1390 = vunpack.c.h.b16 %v768
    %v1391 = vunpack.c.l.b16 %v769
    %v1392 = vunpack.c.h.b16 %v769
    %v1393 = vunpack.c.l.b16 %v770
    %v1394 = vunpack.c.h.b16 %v770
    %v1395 = vunpack.c.l.b16 %v771
    %v1396 = vunpack.c.h.b16 %v771
    %v1397 = vunpack.c.l.b16 %v772
    %v1398 = vunpack.c.h.b16 %v772
    %v1399 = vunpack.c.l.b16 %v773
    %v1400 = vunpack.c.h.b16 %v773
    %v1401 = vunpack.c.l.b16 %v774
    %v1402 = vunpack.c.h.b16 %v774
    %v1403 = vunpack.c.l.b16 %v775
    %v1404 = vunpack.c.h.b16 %v775
    %v1405 = vunpack.c.l.b16 %v776
    %v1406 = vunpack.c.h.b16 %v776
    %v1407 = vunpack.c.l.b16 %v777
    %v1408 = vunpack.c.h.b16 %v777
    %v1409 = vunpack.c.l.b16 %v778
    %v1410 = vunpack.c.h.b16 %v778
    %v1411 = vunpack.c.l.b16 %v779
    %v1412 = vunpack.c.h.b16 %v779
    %v1413 = vunpack.c.l.b16 %v780
    %v1414 = vunpack.c.h.b16 %v780
    %v1415 = vunpack.c.l.b16 %v781
    %v1416 = vunpack.c.h.b16 %v781
    %v1417 = vunpack.c.l.b16 %v782
    %v1418 = vunpack.c.h.b16 %v782
    %v1419 = vunpack.c.l.b16 %v783
    %v1420 = vunpack.c.h.b16 %v783
    %v1421 = vunpack.c.l.b16 %v784
    %v1422 = vunpack.c.h.b16 %v784
    %v1423 = vunpack.c.l.b16 %v785
    %v1424 = vunpack.c.h.b16 %v785
    %v1425 = vunpack.c.l.b16 %v786
    %v1426 = vunpack.c.h.b16 %v786
    %v1427 = vunpack.c.l.b16 %v787
    %v1428 = vunpack.c.h.b16 %v787
    %v1429 = vunpack.c.l.b16 %v788
    %v1430 = vunpack.c.h.b16 %v788
    %v1431 = vunpack.c.l.b16 %v789
    %v1432 = vunpack.c.h.b16 %v789
    %v1433 = vunpack.c.l.b16 %v790
    %v1434 = vunpack.c.h.b16 %v790
    %v1435 = vunpack.c.l.b16 %v791
    %v1436 = vunpack.c.h.b16 %v791
    %v1437 = vunpack.c.l.b16 %v792
    %v1438 = vunpack.c.h.b16 %v792
    %v1439 = vunpack.c.l.b16 %v793
    %v1440 = vunpack.c.h.b16 %v793
    %v1441 = vunpack.c.l.b16 %v794
    %v1442 = vunpack.c.h.b16 %v794
    %v1443 = vunpack.c.l.b16 %v795
    %v1444 = vunpack.c.h.b16 %v795
    %v1445 = vunpack.c.l.b16 %v796
    %v1446 = vunpack.c.h.b16 %v796
    %v1447 = vunpack.c.l.b16 %v797
    %v1448 = vunpack.c.h.b16 %v797
    %v1449 = vunpack.c.l.b16 %v798
    %v1450 = vunpack.c.h.b16 %v798
    %v1451 = vunpack.c.l.b16 %v799
    %v1452 = vunpack.c.h.b16 %v799
    %v1453 = vunpack.c.l.b16 %v800
    %v1454 = vunpack.c.h.b16 %v800
    %v1455 = vunpack.c.l.b16 %v801
    %v1456 = vunpack.c.h.b16 %v801
    %v1457 = vunpack.c.l.b16 %v802
    %v1458 = vunpack.c.h.b16 %v802
    %v1459 = vunpack.c.l.b16 %v803
    %v1460 = vunpack.c.h.b16 %v803
    %v1461 = vunpack.c.l.b16 %v804
    %v1462 = vunpack.c.h.b16 %v804
    %v1463 = vunpack.c.l.b16 %v805
    %v1464 = vunpack.c.h.b16 %v805
    %v1465 = vunpack.c.l.b16 %v806
    %v1466 = vunpack.c.h.b16 %v806
    %v1467 = vunpack.c.l.b16 %v807
    %v1468 = vunpack.c.h.b16 %v807
    %v1469 = vunpack.c.l.b16 %v808
    %v1470 = vunpack.c.h.b16 %v808
    %v1471 = vunpack.c.l.b16 %v809
    %v1472 = vunpack.c.h.b16 %v809
    %v1473 = vunpack.c.l.b16 %v810
    %v1474 = vunpack.c.h.b16 %v810
    %v1475 = vunpack.c.l.b16 %v811
    %v1476 = vunpack.c.h.b16 %v811
    %v1477 = vunpack.c.l.b16 %v812
    %v1478 = vunpack.c.h.b16 %v812
    %v1479 = vunpack.c.l.b16 %v813
    %v1480 = vunpack.c.h.b16 %v813
    %v1481 = vunpack.c.l.b16 %v814
    %v1482 = vunpack.c.h.b16 %v814
    %v1483 = vunpack.c.l.b16 %v815
    %v1484 = vunpack.c.h.b16 %v815
    %v1485 = vunpack.c.l.b16 %v816
    %v1486 = vunpack.c.h.b16 %v816
    %v1487 = vunpack.c.l.b16 %v817
    %v1488 = vunpack.c.h.b16 %v817
    %v1489 = vunpack.c.l.b16 %v818
    %v1490 = vunpack.c.h.b16 %v818
    %v1491 = vunpack.c.l.b16 %v819
    %v1492 = vunpack.c.h.b16 %v819
    %v1493 = vunpack.c.l.b16 %v820
    %v1494 = vunpack.c.h.b16 %v820
    %v1495 = vunpack.c.l.b16 %v821
    %v1496 = vunpack.c.h.b16 %v821
    %v1497 = vunpack.c.l.b16 %v822
    %v1498 = vunpack.c.h.b16 %v822
    %v1499 = vunpack.c.l.b16 %v823
    %v1500 = vunpack.c.h.b16 %v823
    %v1501 = vunpack.c.l.b16 %v824
    %v1502 = vunpack.c.h.b16 %v824
    %v1503 = vunpack.c.l.b16 %v825
    %v1504 = vunpack.c.h.b16 %v825
    %v1505 = vunpack.c.l.b16 %v826
    %v1506 = vunpack.c.h.b16 %v826
    %v1507 = vunpack.c.l.b16 %v827
    %v1508 = vunpack.c.h.b16 %v827
    %v1509 = vunpack.c.l.b16 %v828
    %v1510 = vunpack.c.h.b16 %v828
    %v1511 = vunpack.c.l.b16 %v829
    %v1512 = vunpack.c.h.b16 %v829
    %v1513 = vunpack.c.l.b16 %v830
    %v1514 = vunpack.c.h.b16 %v830
    %v1515 = vunpack.c.l.b16 %v831
    %v1516 = vunpack.c.h.b16 %v831
    %v1517 = vunpack.c.l.b16 %v832
    %v1518 = vunpack.c.h.b16 %v832
    %v1519 = vunpack.c.l.b16 %v833
    %v1520 = vunpack.c.h.b16 %v833
    %v1521 = vunpack.c.l.b16 %v834
    %v1522 = vunpack.c.h.b16 %v834
    %v1523 = vunpack.c.l.b16 %v835
    %v1524 = vunpack.c.h.b16 %v835
    %v1525 = vunpack.c.l.b16 %v836
    %v1526 = vunpack.c.h.b16 %v836
    %v1527 = vunpack.c.l.b16 %v837
    %v1528 = vunpack.c.h.b16 %v837
    %v1529 = vunpack.c.l.b16 %v838
    %v1530 = vunpack.c.h.b16 %v838
    %v1531 = vunpack.c.l.b16 %v839
    %v1532 = vunpack.c.h.b16 %v839
    %v1533 = vunpack.c.l.b16 %v840
    %v1534 = vunpack.c.h.b16 %v840
    %v1535 = vunpack.c.l.b16 %v841
    %v1536 = vunpack.c.h.b16 %v841
    %v1537 = vunpack.c.l.b16 %v842
    %v1538 = vunpack.c.h.b16 %v842
    %v1539 = vunpack.c.l.b16 %v843
    %v1540 = vunpack.c.h.b16 %v843
    %v1541 = vunpack.c.l.b16 %v844
    %v1542 = vunpack.c.h.b16 %v844
    %v1543 = vunpack.c.l.b16 %v845
    %v1544 = vunpack.c.h.b16 %v845
    %v1545 = vunpack.c.l.b16 %v846
    %v1546 = vunpack.c.h.b16 %v846
    %v1547 = vunpack.c.l.b16 %v847
    %v1548 = vunpack.c.h.b16 %v847
    %v1549 = vunpack.c.l.b16 %v848
    %v1550 = vunpack.c.h.b16 %v848
    %v1551 = vunpack.c.l.b16 %v849
    %v1552 = vunpack.c.h.b16 %v849
    %v1553 = vunpack.c.l.b16 %v850
    %v1554 = vunpack.c.h.b16 %v850
    %v1555 = vunpack.c.l.b16 %v851
    %v1556 = vunpack.c.h.b16 %v851
    %v1557 = vunpack.c.l.b16 %v852
    %v1558 = vunpack.c.h.b16 %v852
    %v1559 = vunpack.c.l.b16 %v853
    %v1560 = vunpack.c.h.b16 %v853
    %v1561 = vunpack.c.l.b16 %v854
    %v1562 = vunpack.c.h.b16 %v854
    %v1563 = vunpack.c.l.b16 %v855
    %v1564 = vunpack.c.h.b16 %v855
    %v1565 = vunpack.c.l.b16 %v856
    %v1566 = vunpack.c.h.b16 %v856
    %v1567 = vunpack.c.l.b16 %v857
    %v1568 = vunpack.c.h.b16 %v857
    %v1569 = vunpack.c.l.b16 %v858
    %v1570 = vunpack.c.h.b16 %v858
    %v1571 = vunpack.c.l.b16 %v859
    %v1572 = vunpack.c.h.b16 %v859
    %v1573 = vunpack.c.l.b16 %v860
    %v1574 = vunpack.c.h.b16 %v860
    %v1575 = vunpack.c.l.b16 %v861
    %v1576 = vunpack.c.h.b16 %v861
    %v1577 = vunpack.c.l.b16 %v862
    %v1578 = vunpack.c.h.b16 %v862
    %v1579 = vunpack.c.l.b16 %v863
    %v1580 = vunpack.c.h.b16 %v863
    %v1581 = vunpack.c.l.b16 %v864
    %v1582 = vunpack.c.h.b16 %v864
    %v1583 = vunpack.c.l.b16 %v865
    %v1584 = vunpack.c.h.b16 %v865
    %v1585 = vunpack.c.l.b16 %v866
    %v1586 = vunpack.c.h.b16 %v866
    %v1587 = vunpack.c.l.b16 %v867
    %v1588 = vunpack.c.h.b16 %v867
    %v1589 = vunpack.c.l.b16 %v868
    %v1590 = vunpack.c.h.b16 %v868
    %v1591 = vunpack.c.l.b16 %v869
    %v1592 = vunpack.c.h.b16 %v869
    %v1593 = vunpack.c.l.b16 %v870
    %v1594 = vunpack.c.h.b16 %v870
    %v1595 = vunpack.c.l.b16 %v871
    %v1596 = vunpack.c.h.b16 %v871
    %v1597 = vunpack.c.l.b16 %v872
    %v1598 = vunpack.c.h.b16 %v872
    %v1599 = vunpack.c.l.b16 %v873
    %v1600 = vunpack.c.h.b16 %v873
    %v1601 = vunpack.c.l.b16 %v874
    %v1602 = vunpack.c.h.b16 %v874
    %v1603 = vunpack.c.l.b16 %v875
    %v1604 = vunpack.c.h.b16 %v875
    %v1605 = vunpack.c.l.b16 %v876
    %v1606 = vunpack.c.h.b16 %v876
    %v1607 = vunpack.c.l.b16 %v877
    %v1608 = vunpack.c.h.b16 %v877
    %v1609 = vunpack.c.l.b16 %v878
    %v1610 = vunpack.c.h.b16 %v878
    %v1611 = vunpack.c.l.b16 %v879
    %v1612 = vunpack.c.h.b16 %v879
    %v1613 = vunpack.c.l.b16 %v880
    %v1614 = vunpack.c.h.b16 %v880
    %v1615 = vunpack.c.l.b16 %v881
    %v1616 = vunpack.c.h.b16 %v881
    %v1617 = vunpack.c.l.b16 %v882
    %v1618 = vunpack.c.h.b16 %v882
    %v1619 = vunpack.c.l.b16 %v883
    %v1620 = vunpack.c.h.b16 %v883
    %v1621 = vunpack.c.l.b16 %v884
    %v1622 = vunpack.c.h.b16 %v884
    %v1623 = vunpack.c.l.b16 %v885
    %v1624 = vunpack.c.h.b16 %v885
    %v1625 = vunpack.c.l.b16 %v886
    %v1626 = vunpack.c.h.b16 %v886
    %v1627 = vunpack.c.l.b16 %v887
    %v1628 = vunpack.c.h.b16 %v887
    %v1629 = vunpack.c.l.b16 %v888
    %v1630 = vunpack.c.h.b16 %v888
    %v1631 = vunpack.c.l.b16 %v889
    %v1632 = vunpack.c.h.b16 %v889
    %v1633 = vunpack.c.l.b16 %v890
    %v1634 = vunpack.c.h.b16 %v890
    %v1635 = vunpack.c.l.b16 %v891
    %v1636 = vunpack.c.h.b16 %v891
    %v1637 = vunpack.c.l.b16 %v892
    %v1638 = vunpack.c.h.b16 %v892
    %v1639 = vunpack.c.l.b16 %v893
    %v1640 = vunpack.c.h.b16 %v893
    %v1641 = vunpack.c.l.b16 %v894
    %v1642 = vunpack.c.h.b16 %v894
    %v1643 = vunpack.c.l.b16 %v895
    %v1644 = vunpack.c.h.b16 %v895
    %v1645 = vunpack.c.l.b16 %v896
    %v1646 = vunpack.c.h.b16 %v896
    %v1647 = vunpack.c.l.b16 %v897
    %v1648 = vunpack.c.h.b16 %v897
    %v1649 = vunpack.c.l.b16 %v898
    %v1650 = vunpack.c.h.b16 %v898
    %v1651 = vunpack.c.l.b16 %v899
    %v1652 = vunpack.c.h.b16 %v899
    %v1653 = vunpack.c.l.b16 %v900
    %v1654 = vunpack.c.h.b16 %v900
    %v1655 = vunpack.c.l.b16 %v901
    %v1656 = vunpack.c.h.b16 %v901
    %v1657 = vunpack.c.l.b16 %v902
    %v1658 = vunpack.c.h.b16 %v902
    %v1659 = vunpack.c.l.b16 %v903
    %v1660 = vunpack.c.h.b16 %v903
    %v1661 = vunpack.c.l.b16 %v904
    %v1662 = vunpack.c.h.b16 %v904
    %v1663 = vunpack.c.l.b16 %v905
    %v1664 = vunpack.c.h.b16 %v905
    %v1665 = vunpack.c.l.b16 %v906
    %v1666 = vunpack.c.h.b16 %v906
    %v1667 = vunpack.c.l.b16 %v907
    %v1668 = vunpack.c.h.b16 %v907
    %v1669 = vunpack.c.l.b16 %v908
    %v1670 = vunpack.c.h.b16 %v908
    %v1671 = vunpack.c.l.b16 %v909
    %v1672 = vunpack.c.h.b16 %v909
    %v1673 = vunpack.c.l.b16 %v910
    %v1674 = vunpack.c.h.b16 %v910
    %v1675 = vunpack.c.l.b16 %v911
    %v1676 = vunpack.c.h.b16 %v911
    %v1677 = vunpack.c.l.b16 %v912
    %v1678 = vunpack.c.h.b16 %v912
    %v1679 = vunpack.c.l.b16 %v913
    %v1680 = vunpack.c.h.b16 %v913
    %v1681 = vunpack.c.l.b16 %v914
    %v1682 = vunpack.c.h.b16 %v914
    %v1683 = vunpack.c.l.b16 %v915
    %v1684 = vunpack.c.h.b16 %v915
    %v1685 = vunpack.c.l.b16 %v916
    %v1686 = vunpack.c.h.b16 %v916
    %v1687 = vunpack.c.l.b16 %v917
    %v1688 = vunpack.c.h.b16 %v917
    %v1689 = vunpack.c.l.b16 %v918
    %v1690 = vunpack.c.h.b16 %v918
    %v1691 = vunpack.c.l.b16 %v919
    %v1692 = vunpack.c.h.b16 %v919
    %v1693 = vunpack.c.l.b16 %v920
    %v1694 = vunpack.c.h.b16 %v920
    %v1695 = vunpack.c.l.b16 %v921
    %v1696 = vunpack.c.h.b16 %v921
    %v1697 = vunpack.c.l.b16 %v922
    %v1698 = vunpack.c.h.b16 %v922
    %v1699 = vunpack.c.l.b16 %v923
    %v1700 = vunpack.c.h.b16 %v923
    %v1701 = vunpack.c.l.b16 %v924
    %v1702 = vunpack.c.h.b16 %v924
    %v1703 = vunpack.c.l.b16 %v925
    %v1704 = vunpack.c.h.b16 %v925
    %v1705 = vunpack.c.l.b16 %v926
    %v1706 = vunpack.c.h.b16 %v926
    %v1707 = vunpack.c.l.b16 %v927
    %v1708 = vunpack.c.h.b16 %v927
    %v1709 = vunpack.c.l.b16 %v928
    %v1710 = vunpack.c.h.b16 %v928
    %v1711 = vunpack.c.l.b16 %v929
    %v1712 = vunpack.c.h.b16 %v929
    %v1713 = vunpack.c.l.b16 %v930
    %v1714 = vunpack.c.h.b16 %v930
    %v1715 = vunpack.c.l.b16 %v931
    %v1716 = vunpack.c.h.b16 %v931
    %v1717 = vunpack.c.l.b16 %v932
    %v1718 = vunpack.c.h.b16 %v932
    %v1719 = vunpack.c.l.b16 %v933
    %v1720 = vunpack.c.h.b16 %v933
    %v1721 = vunpack.c.l.b16 %v934
    %v1722 = vunpack.c.h.b16 %v934
    %v1723 = vunpack.c.l.b16 %v935
    %v1724 = vunpack.c.h.b16 %v935
    %v1725 = vunpack.c.l.b16 %v936
    %v1726 = vunpack.c.h.b16 %v936
    %v1727 = vpack.c.b16 %v1219, %v1215
    %v1728 = vpack.c.b16 %v1220, %v1216
    %v1729 = vpack.c.b16 %v1221, %v1217
    %v1730 = vpack.c.b16 %v1222, %v1218
    %v1731 = vpack.c.b16 %v1227, %v1223
    %v1732 = vpack.c.b16 %v1228, %v1224
    %v1733 = vpack.c.b16 %v1229, %v1225
    %v1734 = vpack.c.b16 %v1230, %v1226
    %v1735 = vpack.c.b16 %v1235, %v1231
    %v1736 = vpack.c.b16 %v1236, %v1232
    %v1737 = vpack.c.b16 %v1237, %v1233
    %v1738 = vpack.c.b16 %v1238, %v1234
    %v1739 = vpack.c.b16 %v1243, %v1239
    %v1740 = vpack.c.b16 %v1244, %v1240
    %v1741 = vpack.c.b16 %v1245, %v1241
    %v1742 = vpack.c.b16 %v1246, %v1242
    %v1743 = vpack.c.b16 %v1251, %v1247
    %v1744 = vpack.c.b16 %v1252, %v1248
    %v1745 = vpack.c.b16 %v1253, %v1249
    %v1746 = vpack.c.b16 %v1254, %v1250
    %v1747 = vpack.c.b16 %v1259, %v1255
    %v1748 = vpack.c.b16 %v1260, %v1256
    %v1749 = vpack.c.b16 %v1261, %v1257
    %v1750 = vpack.c.b16 %v1262, %v1258
    %v1751 = vpack.c.b16 %v1267, %v1263
    %v1752 = vpack.c.b16 %v1268, %v1264
    %v1753 = vpack.c.b16 %v1269, %v1265
    %v1754 = vpack.c.b16 %v1270, %v1266
    %v1755 = vpack.c.b16 %v1275, %v1271
    %v1756 = vpack.c.b16 %v1276, %v1272
    %v1757 = vpack.c.b16 %v1277, %v1273
    %v1758 = vpack.c.b16 %v1278, %v1274
    %v1759 = vpack.c.b16 %v1283, %v1279
    %v1760 = vpack.c.b16 %v1284, %v1280
    %v1761 = vpack.c.b16 %v1285, %v1281
    %v1762 = vpack.c.b16 %v1286, %v1282
    %v1763 = vpack.c.b16 %v1291, %v1287
    %v1764 = vpack.c.b16 %v1292, %v1288
    %v1765 = vpack.c.b16 %v1293, %v1289
    %v1766 = vpack.c.b16 %v1294, %v1290
    %v1767 = vpack.c.b16 %v1299, %v1295
    %v1768 = vpack.c.b16 %v1300, %v1296
    %v1769 = vpack.c.b16 %v1301, %v1297
    %v1770 = vpack.c.b16 %v1302, %v1298
    %v1771 = vpack.c.b16 %v1307, %v1303
    %v1772 = vpack.c.b16 %v1308, %v1304
    %v1773 = vpack.c.b16 %v1309, %v1305
    %v1774 = vpack.c.b16 %v1310, %v1306
    %v1775 = vpack.c.b16 %v1315, %v1311
    %v1776 = vpack.c.b16 %v1316, %v1312
    %v1777 = vpack.c.b16 %v1317, %v1313
    %v1778 = vpack.c.b16 %v1318, %v1314
    %v1779 = vpack.c.b16 %v1323, %v1319
    %v1780 = vpack.c.b16 %v1324, %v1320
    %v1781 = vpack.c.b16 %v1325, %v1321
    %v1782 = vpack.c.b16 %v1326, %v1322
    %v1783 = vpack.c.b16 %v1331, %v1327
    %v1784 = vpack.c.b16 %v1332, %v1328
    %v1785 = vpack.c.b16 %v1333, %v1329
    %v1786 = vpack.c.b16 %v1334, %v1330
    %v1787 = vpack.c.b16 %v1339, %v1335
    %v1788 = vpack.c.b16 %v1340, %v1336
    %v1789 = vpack.c.b16 %v1341, %v1337
    %v1790 = vpack.c.b16 %v1342, %v1338
    %v1791 = vpack.c.b16 %v1347, %v1343
    %v1792 = vpack.c.b16 %v1348, %v1344
    %v1793 = vpack.c.b16 %v1349, %v1345
    %v1794 = vpack.c.b16 %v1350, %v1346
    %v1795 = vpack.c.b16 %v1355, %v1351
    %v1796 = vpack.c.b16 %v1356, %v1352
    %v1797 = vpack.c.b16 %v1357, %v1353
    %v1798 = vpack.c.b16 %v1358, %v1354
    %v1799 = vpack.c.b16 %v1363, %v1359
    %v1800 = vpack.c.b16 %v1364, %v1360
    %v1801 = vpack.c.b16 %v1365, %v1361
    %v1802 = vpack.c.b16 %v1366, %v1362
    %v1803 = vpack.c.b16 %v1371, %v1367
    %v1804 = vpack.c.b16 %v1372, %v1368
    %v1805 = vpack.c.b16 %v1373, %v1369
    %v1806 = vpack.c.b16 %v1374, %v1370
    %v1807 = vpack.c.b16 %v1379, %v1375
    %v1808 = vpack.c.b16 %v1380, %v1376
    %v1809 = vpack.c.b16 %v1381, %v1377
    %v1810 = vpack.c.b16 %v1382, %v1378
    %v1811 = vpack.c.b16 %v1387, %v1383
    %v1812 = vpack.c.b16 %v1388, %v1384
    %v1813 = vpack.c.b16 %v1389, %v1385
    %v1814 = vpack.c.b16 %v1390, %v1386
    %v1815 = vpack.c.b16 %v1395, %v1391
    %v1816 = vpack.c.b16 %v1396, %v1392
    %v1817 = vpack.c.b16 %v1397, %v1393
    %v1818 = vpack.c.b16 %v1398, %v1394
    %v1819 = vpack.c.b16 %v1403, %v1399
    %v1820 = vpack.c.b16 %v1404, %v1400
    %v1821 = vpack.c.b16 %v1405, %v1401
    %v1822 = vpack.c.b16 %v1406, %v1402
    %v1823 = vpack.c.b16 %v1411, %v1407
    %v1824 = vpack.c.b16 %v1412, %v1408
    %v1825 = vpack.c.b16 %v1413, %v1409
    %v1826 = vpack.c.b16 %v1414, %v1410
    %v1827 = vpack.c.b16 %v1419, %v1415
    %v1828 = vpack.c.b16 %v1420, %v1416
    %v1829 = vpack.c.b16 %v1421, %v1417
    %v1830 = vpack.c.b16 %v1422, %v1418
    %v1831 = vpack.c.b16 %v1427, %v1423
    %v1832 = vpack.c.b16 %v1428, %v1424
    %v1833 = vpack.c.b16 %v1429, %v1425
    %v1834 = vpack.c.b16 %v1430, %v1426
    %v1835 = vpack.c.b16 %v1435, %v1431
    %v1836 = vpack.c.b16 %v1436, %v1432
    %v1837 = vpack.c.b16 %v1437, %v1433
    %v1838 = vpack.c.b16 %v1438, %v1434
    %v1839 = vpack.c.b16 %v1443, %v1439
    %v1840 = vpack.c.b16 %v1444, %v1440
    %v1841 = vpack.c.b16 %v1445, %v1441
    %v1842 = vpack.c.b16 %v1446, %v1442
    %v1843 = vpack.c.b16 %v1451, %v1447
    %v1844 = vpack.c.b16 %v1452, %v1448
    %v1845 = vpack.c.b16 %v1453, %v1449
    %v1846 = vpack.c.b16 %v1454, %v1450
    %v1847 = vpack.c.b16 %v1459, %v1455
    %v1848 = vpack.c.b16 %v1460, %v1456
    %v1849 = vpack.c.b16 %v1461, %v1457
    %v1850 = vpack.c.b16 %v1462, %v1458
    %v1851 = vpack.c.b16 %v1467, %v1463
    %v1852 = vpack.c.b16 %v1468, %v1464
    %v1853 = vpack.c.b16 %v1469, %v1465
    %v1854 = vpack.c.b16 %v1470, %v1466
    %v1855 = vpack.c.b16 %v1475, %v1471
    %v1856 = vpack.c.b16 %v1476, %v1472
    %v1857 = vpack.c.b16 %v1477, %v1473
    %v1858 = vpack.c.b16 %v1478, %v1474
    %v1859 = vpack.c.b16 %v1483, %v1479
    %v1860 = vpack.c.b16 %v1484, %v1480
    %v1861 = vpack.c.b16 %v1485, %v1481
    %v1862 = vpack.c.b16 %v1486, %v1482
    %v1863 = vpack.c.b16 %v1491, %v1487
    %v1864 = vpack.c.b16 %v1492, %v1488
    %v1865 = vpack.c.b16 %v1493, %v1489
    %v1866 = vpack.c.b16 %v1494, %v1490
    %v1867 = vpack.c.b16 %v1499, %v1495
    %v1868 = vpack.c.b16 %v1500, %v1496
    %v1869 = vpack.c.b16 %v1501, %v1497
    %v1870 = vpack.c.b16 %v1502, %v1498
    %v1871 = vpack.c.b16 %v1507, %v1503
    %v1872 = vpack.c.b16 %v1508, %v1504
    %v1873 = vpack.c.b16 %v1509, %v1505
    %v1874 = vpack.c.b16 %v1510, %v1506
    %v1875 = vpack.c.b16 %v1515, %v1511
    %v1876 = vpack.c.b16 %v1516, %v1512
    %v1877 = vpack.c.b16 %v1517, %v1513
    %v1878 = vpack.c.b16 %v1518, %v1514
    %v1879 = vpack.c.b16 %v1523, %v1519
    %v1880 = vpack.c.b16 %v1524, %v1520
    %v1881 = vpack.c.b16 %v1525, %v1521
    %v1882 = vpack.c.b16 %v1526, %v1522
    %v1883 = vpack.c.b16 %v1531, %v1527
    %v1884 = vpack.c.b16 %v1532, %v1528
    %v1885 = vpack.c.b16 %v1533, %v1529
    %v1886 = vpack.c.b16 %v1534, %v1530
    %v1887 = vpack.c.b16 %v1539, %v1535
    %v1888 = vpack.c.b16 %v1540, %v1536
    %v1889 = vpack.c.b16 %v1541, %v1537
    %v1890 = vpack.c.b16 %v1542, %v1538
    %v1891 = vpack.c.b16 %v1547, %v1543
    %v1892 = vpack.c.b16 %v1548, %v1544
    %v1893 = vpack.c.b16 %v1549, %v1545
    %v1894 = vpack.c.b16 %v1550, %v1546
    %v1895 = vpack.c.b16 %v1555, %v1551
    %v1896 = vpack.c.b16 %v1556, %v1552
    %v1897 = vpack.c.b16 %v1557, %v1553
    %v1898 = vpack.c.b16 %v1558, %v1554
    %v1899 = vpack.c.b16 %v1563, %v1559
    %v1900 = vpack.c.b16 %v1564, %v1560
    %v1901 = vpack.c.b16 %v1565, %v1561
    %v1902 = vpack.c.b16 %v1566, %v1562
    %v1903 = vpack.c.b16 %v1571, %v1567
    %v1904 = vpack.c.b16 %v1572, %v1568
    %v1905 = vpack.c.b16 %v1573, %v1569
    %v1906 = vpack.c.b16 %v1574, %v1570
    %v1907 = vpack.c.b16 %v1579, %v1575
    %v1908 = vpack.c.b16 %v1580, %v1576
    %v1909 = vpack.c.b16 %v1581, %v1577
    %v1910 = vpack.c.b16 %v1582, %v1578
    %v1911 = vpack.c.b16 %v1587, %v1583
    %v1912 = vpack.c.b16 %v1588, %v1584
    %v1913 = vpack.c.b16 %v1589, %v1585
    %v1914 = vpack.c.b16 %v1590, %v1586
    %v1915 = vpack.c.b16 %v1595, %v1591
    %v1916 = vpack.c.b16 %v1596, %v1592
    %v1917 = vpack.c.b16 %v1597, %v1593
    %v1918 = vpack.c.b16 %v1598, %v1594
    %v1919 = vpack.c.b16 %v1603, %v1599
    %v1920 = vpack.c.b16 %v1604, %v1600
    %v1921 = vpack.c.b16 %v1605, %v1601
    %v1922 = vpack.c.b16 %v1606, %v1602
    %v1923 = vpack.c.b16 %v1611, %v1607
    %v1924 = vpack.c.b16 %v1612, %v1608
    %v1925 = vpack.c.b16 %v1613, %v1609
    %v1926 = vpack.c.b16 %v1614, %v1610
    %v1927 = vpack.c.b16 %v1619, %v1615
    %v1928 = vpack.c.b16 %v1620, %v1616
    %v1929 = vpack.c.b16 %v1621, %v1617
    %v1930 = vpack.c.b16 %v1622, %v1618
    %v1931 = vpack.c.b16 %v1627, %v1623
    %v1932 = vpack.c.b16 %v1628, %v1624
    %v1933 = vpack.c.b16 %v1629, %v1625
    %v1934 = vpack.c.b16 %v1630, %v1626
    %v1935 = vpack.c.b16 %v1635, %v1631
    %v1936 = vpack.c.b16 %v1636, %v1632
    %v1937 = vpack.c.b16 %v1637, %v1633
    %v1938 = vpack.c.b16 %v1638, %v1634
    %v1939 = vpack.c.b16 %v1643, %v1639
    %v1940 = vpack.c.b16 %v1644, %v1640
    %v1941 = vpack.c.b16 %v1645, %v1641
    %v1942 = vpack.c.b16 %v1646, %v1642
    %v1943 = vpack.c.b16 %v1651, %v1647
    %v1944 = vpack.c.b16 %v1652, %v1648
    %v1945 = vpack.c.b16 %v1653, %v1649
    %v1946 = vpack.c.b16 %v1654, %v1650
    %v1947 = vpack.c.b16 %v1659, %v1655
    %v1948 = vpack.c.b16 %v1660, %v1656
    %v1949 = vpack.c.b16 %v1661, %v1657
    %v1950 = vpack.c.b16 %v1662, %v1658
    %v1951 = vpack.c.b16 %v1667, %v1663
    %v1952 = vpack.c.b16 %v1668, %v1664
    %v1953 = vpack.c.b16 %v1669, %v1665
    %v1954 = vpack.c.b16 %v1670, %v1666
    %v1955 = vpack.c.b16 %v1675, %v1671
    %v1956 = vpack.c.b16 %v1676, %v1672
    %v1957 = vpack.c.b16 %v1677, %v1673
    %v1958 = vpack.c.b16 %v1678, %v1674
    %v1959 = vpack.c.b16 %v1683, %v1679
    %v1960 = vpack.c.b16 %v1684, %v1680
    %v1961 = vpack.c.b16 %v1685, %v1681
    %v1962 = vpack.c.b16 %v1686, %v1682
    %v1963 = vpack.c.b16 %v1691, %v1687
    %v1964 = vpack.c.b16 %v1692, %v1688
    %v1965 = vpack.c.b16 %v1693, %v1689
    %v1966 = vpack.c.b16 %v1694, %v1690
    %v1967 = vpack.c.b16 %v1699, %v1695
    %v1968 = vpack.c.b16 %v1700, %v1696
    %v1969 = vpack.c.b16 %v1701, %v1697
    %v1970 = vpack.c.b16 %v1702, %v1698
    %v1971 = vpack.c.b16 %v1707, %v1703
    %v1972 = vpack.c.b16 %v1708, %v1704
    %v1973 = vpack.c.b16 %v1709, %v1705
    %v1974 = vpack.c.b16 %v1710, %v1706
    %v1975 = vpack.c.b16 %v1715, %v1711
    %v1976 = vpack.c.b16 %v1716, %v1712
    %v1977 = vpack.c.b16 %v1717, %v1713
    %v1978 = vpack.c.b16 %v1718, %v1714
    %v1979 = vpack.c.b16 %v1723, %v1719
    %v1980 = vpack.c.b16 %v1724, %v1720
    %v1981 = vpack.c.b16 %v1725, %v1721
    %v1982 = vpack.c.b16 %v1726, %v1722
    %2239 = vmatprep.subr.bf16.mxu0 %v1756
    %2240 = vmatpush1.bf16.msra.mxu0 %v1755
    %2241 = vmatprep.subr.bf16.mxu0 %v1752
    %2242 = vmatpush1.bf16.msra.mxu0 %v1751
    %2243 = vmatprep.subr.bf16.mxu0 %v1748
    %2244 = vmatpush1.bf16.msra.mxu0 %v1747
    %2245 = vmatprep.subr.bf16.mxu0 %v1744
    %2246 = vmatpush1.bf16.msra.mxu0 %v1743
    %2247 = vmatprep.subr.bf16.mxu0 %v1740
    %2248 = vmatpush1.bf16.msra.mxu0 %v1739
    %2249 = vmatprep.subr.bf16.mxu0 %v1736
    %2250 = vmatpush1.bf16.msra.mxu0 %v1735
    %2251 = vmatprep.subr.bf16.mxu0 %v1732
    %2252 = vmatpush1.bf16.msra.mxu0 %v1731
    %2253 = vmatprep.subr.bf16.mxu0 %v1728
    %2254 = vmatpush1.bf16.msra.mxu0 %v1727
    %2255 = vmatprep.subr.bf16.mxu0 %v1788
    %2256 = vmatpush2.bf16.msra.mxu0 %v1787
    %2257 = vmatprep.subr.bf16.mxu0 %v1784
    %2258 = vmatpush2.bf16.msra.mxu0 %v1783
    %2259 = vmatprep.subr.bf16.mxu0 %v1780
    %2260 = vmatpush2.bf16.msra.mxu0 %v1779
    %2261 = vmatprep.subr.bf16.mxu0 %v1776
    %2262 = vmatpush2.bf16.msra.mxu0 %v1775
    %2263 = vmatprep.subr.bf16.mxu0 %v1772
    %2264 = vmatpush2.bf16.msra.mxu0 %v1771
    %2265 = vmatprep.subr.bf16.mxu0 %v1768
    %2266 = vmatpush2.bf16.msra.mxu0 %v1767
    %2267 = vmatprep.subr.bf16.mxu0 %v1764
    %2268 = vmatpush2.bf16.msra.mxu0 %v1763
    %2269 = vmatprep.subr.bf16.mxu0 %v1760
    %2270 = vmatpush2.bf16.msra.mxu0 %v1759
    %2271 = vmatprep.mubr.bf16.mxu0 %v674
    %2272 = vmatmul.mubr.bf16.gmra.mxu0 %v673
    %v2273 = vpop.f32.mrf.mxu0
    %v2274 = vadd.f32 %v942, %v2273
    %v2275 = vpop.f32.mrf.mxu0
    %v2276 = vadd.f32 %v946, %v2275
    %v2277 = vpop.f32.mrf.mxu0
    %v2278 = vpop.f32.mrf.mxu0
    %2279 = vdwg.mxu0
    %2280 = vmatprep.subr.bf16.mxu0 %v1820
    %2281 = vmatpush1.bf16.msra.mxu0 %v1819
    %2282 = vmatprep.subr.bf16.mxu0 %v1816
    %2283 = vmatpush1.bf16.msra.mxu0 %v1815
    %2284 = vmatprep.subr.bf16.mxu0 %v1812
    %2285 = vmatpush1.bf16.msra.mxu0 %v1811
    %2286 = vmatprep.subr.bf16.mxu0 %v1808
    %2287 = vmatpush1.bf16.msra.mxu0 %v1807
    %2288 = vmatprep.subr.bf16.mxu0 %v1804
    %2289 = vmatpush1.bf16.msra.mxu0 %v1803
    %2290 = vmatprep.subr.bf16.mxu0 %v1800
    %2291 = vmatpush1.bf16.msra.mxu0 %v1799
    %2292 = vmatprep.subr.bf16.mxu0 %v1796
    %2293 = vmatpush1.bf16.msra.mxu0 %v1795
    %2294 = vmatprep.subr.bf16.mxu0 %v1792
    %2295 = vmatpush1.bf16.msra.mxu0 %v1791
    %2296 = vmatprep.subr.bf16.mxu0 %v1852
    %2297 = vmatpush2.bf16.msra.mxu0 %v1851
    %2298 = vmatprep.subr.bf16.mxu0 %v1848
    %2299 = vmatpush2.bf16.msra.mxu0 %v1847
    %2300 = vmatprep.subr.bf16.mxu0 %v1844
    %2301 = vmatpush2.bf16.msra.mxu0 %v1843
    %2302 = vmatprep.subr.bf16.mxu0 %v1840
    %2303 = vmatpush2.bf16.msra.mxu0 %v1839
    %2304 = vmatprep.subr.bf16.mxu0 %v1836
    %2305 = vmatpush2.bf16.msra.mxu0 %v1835
    %2306 = vmatprep.subr.bf16.mxu0 %v1832
    %2307 = vmatpush2.bf16.msra.mxu0 %v1831
    %2308 = vmatprep.subr.bf16.mxu0 %v1828
    %2309 = vmatpush2.bf16.msra.mxu0 %v1827
    %2310 = vmatprep.subr.bf16.mxu0 %v1824
    %2311 = vmatpush2.bf16.msra.mxu0 %v1823
    %2312 = vmatprep.mubr.bf16.mxu0 %v676
    %2313 = vmatmul.mubr.bf16.gmra.mxu0 %v675
    %v2314 = vpop.f32.mrf.mxu0
    %v2315 = vadd.f32 %v2274, %v2314
    %v2316 = vpop.f32.mrf.mxu0
    %v2317 = vadd.f32 %v2276, %v2316
    %v2318 = vpop.f32.mrf.mxu0
    %v2319 = vpop.f32.mrf.mxu0
    %2320 = vdwg.mxu0
    %2321 = vmatprep.subr.bf16.mxu0 %v1884
    %2322 = vmatpush1.bf16.msra.mxu0 %v1883
    %2323 = vmatprep.subr.bf16.mxu0 %v1880
    %2324 = vmatpush1.bf16.msra.mxu0 %v1879
    %2325 = vmatprep.subr.bf16.mxu0 %v1876
    %2326 = vmatpush1.bf16.msra.mxu0 %v1875
    %2327 = vmatprep.subr.bf16.mxu0 %v1872
    %2328 = vmatpush1.bf16.msra.mxu0 %v1871
    %2329 = vmatprep.subr.bf16.mxu0 %v1868
    %2330 = vmatpush1.bf16.msra.mxu0 %v1867
    %2331 = vmatprep.subr.bf16.mxu0 %v1864
    %2332 = vmatpush1.bf16.msra.mxu0 %v1863
    %2333 = vmatprep.subr.bf16.mxu0 %v1860
    %2334 = vmatpush1.bf16.msra.mxu0 %v1859
    %2335 = vmatprep.subr.bf16.mxu0 %v1856
    %2336 = vmatpush1.bf16.msra.mxu0 %v1855
    %2337 = vmatprep.subr.bf16.mxu0 %v1916
    %2338 = vmatpush2.bf16.msra.mxu0 %v1915
    %2339 = vmatprep.subr.bf16.mxu0 %v1912
    %2340 = vmatpush2.bf16.msra.mxu0 %v1911
    %2341 = vmatprep.subr.bf16.mxu0 %v1908
    %2342 = vmatpush2.bf16.msra.mxu0 %v1907
    %2343 = vmatprep.subr.bf16.mxu0 %v1904
    %2344 = vmatpush2.bf16.msra.mxu0 %v1903
    %2345 = vmatprep.subr.bf16.mxu0 %v1900
    %2346 = vmatpush2.bf16.msra.mxu0 %v1899
    %2347 = vmatprep.subr.bf16.mxu0 %v1896
    %2348 = vmatpush2.bf16.msra.mxu0 %v1895
    %2349 = vmatprep.subr.bf16.mxu0 %v1892
    %2350 = vmatpush2.bf16.msra.mxu0 %v1891
    %2351 = vmatprep.subr.bf16.mxu0 %v1888
    %2352 = vmatpush2.bf16.msra.mxu0 %v1887
    %2353 = vmatprep.mubr.bf16.mxu0 %v678
    %2354 = vmatmul.mubr.bf16.gmra.mxu0 %v677
    %v2355 = vpop.f32.mrf.mxu0
    %v2356 = vadd.f32 %v2315, %v2355
    %v2357 = vpop.f32.mrf.mxu0
    %v2358 = vadd.f32 %v2317, %v2357
    %v2359 = vpop.f32.mrf.mxu0
    %v2360 = vpop.f32.mrf.mxu0
    %2361 = vdwg.mxu0
    %2362 = vmatprep.subr.bf16.mxu0 %v1948
    %2363 = vmatpush1.bf16.msra.mxu0 %v1947
    %2364 = vmatprep.subr.bf16.mxu0 %v1944
    %2365 = vmatpush1.bf16.msra.mxu0 %v1943
    %2366 = vmatprep.subr.bf16.mxu0 %v1940
    %2367 = vmatpush1.bf16.msra.mxu0 %v1939
    %2368 = vmatprep.subr.bf16.mxu0 %v1936
    %2369 = vmatpush1.bf16.msra.mxu0 %v1935
    %2370 = vmatprep.subr.bf16.mxu0 %v1932
    %2371 = vmatpush1.bf16.msra.mxu0 %v1931
    %2372 = vmatprep.subr.bf16.mxu0 %v1928
    %2373 = vmatpush1.bf16.msra.mxu0 %v1927
    %2374 = vmatprep.subr.bf16.mxu0 %v1924
    %2375 = vmatpush1.bf16.msra.mxu0 %v1923
    %2376 = vmatprep.subr.bf16.mxu0 %v1920
    %2377 = vmatpush1.bf16.msra.mxu0 %v1919
    %2378 = vmatprep.subr.bf16.mxu0 %v1980
    %2379 = vmatpush2.bf16.msra.mxu0 %v1979
    %2380 = vmatprep.subr.bf16.mxu0 %v1976
    %2381 = vmatpush2.bf16.msra.mxu0 %v1975
    %2382 = vmatprep.subr.bf16.mxu0 %v1972
    %2383 = vmatpush2.bf16.msra.mxu0 %v1971
    %2384 = vmatprep.subr.bf16.mxu0 %v1968
    %2385 = vmatpush2.bf16.msra.mxu0 %v1967
    %2386 = vmatprep.subr.bf16.mxu0 %v1964
    %2387 = vmatpush2.bf16.msra.mxu0 %v1963
    %2388 = vmatprep.subr.bf16.mxu0 %v1960
    %2389 = vmatpush2.bf16.msra.mxu0 %v1959
    %2390 = vmatprep.subr.bf16.mxu0 %v1956
    %2391 = vmatpush2.bf16.msra.mxu0 %v1955
    %2392 = vmatprep.subr.bf16.mxu0 %v1952
    %2393 = vmatpush2.bf16.msra.mxu0 %v1951
    %2394 = vmatprep.mubr.bf16.mxu0 %v680
    %2395 = vmatmul.mubr.bf16.gmra.mxu0 %v679
    %v2396 = vpop.f32.mrf.mxu0
    %v2397 = vadd.f32 %v2356, %v2396
    %v2398 = vpop.f32.mrf.mxu0
    %v2399 = vadd.f32 %v2358, %v2398
    %v2400 = vpop.f32.mrf.mxu0
    %v2401 = vpop.f32.mrf.mxu0
    %2402 = vdwg.mxu0
    %2403 = vmatprep.subr.bf16.mxu0 %v1758
    %2404 = vmatpush1.bf16.msra.mxu0 %v1757
    %2405 = vmatprep.subr.bf16.mxu0 %v1754
    %2406 = vmatpush1.bf16.msra.mxu0 %v1753
    %2407 = vmatprep.subr.bf16.mxu0 %v1750
    %2408 = vmatpush1.bf16.msra.mxu0 %v1749
    %2409 = vmatprep.subr.bf16.mxu0 %v1746
    %2410 = vmatpush1.bf16.msra.mxu0 %v1745
    %2411 = vmatprep.subr.bf16.mxu0 %v1742
    %2412 = vmatpush1.bf16.msra.mxu0 %v1741
    %2413 = vmatprep.subr.bf16.mxu0 %v1738
    %2414 = vmatpush1.bf16.msra.mxu0 %v1737
    %2415 = vmatprep.subr.bf16.mxu0 %v1734
    %2416 = vmatpush1.bf16.msra.mxu0 %v1733
    %2417 = vmatprep.subr.bf16.mxu0 %v1730
    %2418 = vmatpush1.bf16.msra.mxu0 %v1729
    %2419 = vmatprep.subr.bf16.mxu0 %v1790
    %2420 = vmatpush2.bf16.msra.mxu0 %v1789
    %2421 = vmatprep.subr.bf16.mxu0 %v1786
    %2422 = vmatpush2.bf16.msra.mxu0 %v1785
    %2423 = vmatprep.subr.bf16.mxu0 %v1782
    %2424 = vmatpush2.bf16.msra.mxu0 %v1781
    %2425 = vmatprep.subr.bf16.mxu0 %v1778
    %2426 = vmatpush2.bf16.msra.mxu0 %v1777
    %2427 = vmatprep.subr.bf16.mxu0 %v1774
    %2428 = vmatpush2.bf16.msra.mxu0 %v1773
    %2429 = vmatprep.subr.bf16.mxu0 %v1770
    %2430 = vmatpush2.bf16.msra.mxu0 %v1769
    %2431 = vmatprep.subr.bf16.mxu0 %v1766
    %2432 = vmatpush2.bf16.msra.mxu0 %v1765
    %2433 = vmatprep.subr.bf16.mxu0 %v1762
    %2434 = vmatpush2.bf16.msra.mxu0 %v1761
    %2435 = vmatprep.mubr.bf16.mxu0 %v674
    %2436 = vmatmul.mubr.bf16.gmra.mxu0 %v673
    %v2437 = vpop.f32.mrf.mxu0
    %v2438 = vadd.f32 %v950, %v2437
    %v2439 = vpop.f32.mrf.mxu0
    %v2440 = vadd.f32 %v954, %v2439
    %v2441 = vpop.f32.mrf.mxu0
    %v2442 = vpop.f32.mrf.mxu0
    %2443 = vdwg.mxu0
    %2444 = vmatprep.subr.bf16.mxu0 %v1822
    %2445 = vmatpush1.bf16.msra.mxu0 %v1821
    %2446 = vmatprep.subr.bf16.mxu0 %v1818
    %2447 = vmatpush1.bf16.msra.mxu0 %v1817
    %2448 = vmatprep.subr.bf16.mxu0 %v1814
    %2449 = vmatpush1.bf16.msra.mxu0 %v1813
    %2450 = vmatprep.subr.bf16.mxu0 %v1810
    %2451 = vmatpush1.bf16.msra.mxu0 %v1809
    %2452 = vmatprep.subr.bf16.mxu0 %v1806
    %2453 = vmatpush1.bf16.msra.mxu0 %v1805
    %2454 = vmatprep.subr.bf16.mxu0 %v1802
    %2455 = vmatpush1.bf16.msra.mxu0 %v1801
    %2456 = vmatprep.subr.bf16.mxu0 %v1798
    %2457 = vmatpush1.bf16.msra.mxu0 %v1797
    %2458 = vmatprep.subr.bf16.mxu0 %v1794
    %2459 = vmatpush1.bf16.msra.mxu0 %v1793
    %2460 = vmatprep.subr.bf16.mxu0 %v1854
    %2461 = vmatpush2.bf16.msra.mxu0 %v1853
    %2462 = vmatprep.subr.bf16.mxu0 %v1850
    %2463 = vmatpush2.bf16.msra.mxu0 %v1849
    %2464 = vmatprep.subr.bf16.mxu0 %v1846
    %2465 = vmatpush2.bf16.msra.mxu0 %v1845
    %2466 = vmatprep.subr.bf16.mxu0 %v1842
    %2467 = vmatpush2.bf16.msra.mxu0 %v1841
    %2468 = vmatprep.subr.bf16.mxu0 %v1838
    %2469 = vmatpush2.bf16.msra.mxu0 %v1837
    %2470 = vmatprep.subr.bf16.mxu0 %v1834
    %2471 = vmatpush2.bf16.msra.mxu0 %v1833
    %2472 = vmatprep.subr.bf16.mxu0 %v1830
    %2473 = vmatpush2.bf16.msra.mxu0 %v1829
    %2474 = vmatprep.subr.bf16.mxu0 %v1826
    %2475 = vmatpush2.bf16.msra.mxu0 %v1825
    %2476 = vmatprep.mubr.bf16.mxu0 %v676
    %2477 = vmatmul.mubr.bf16.gmra.mxu0 %v675
    %v2478 = vpop.f32.mrf.mxu0
    %v2479 = vadd.f32 %v2438, %v2478
    %v2480 = vpop.f32.mrf.mxu0
    %v2481 = vadd.f32 %v2440, %v2480
    %v2482 = vpop.f32.mrf.mxu0
    %v2483 = vpop.f32.mrf.mxu0
    %2484 = vdwg.mxu0
    %2485 = vmatprep.subr.bf16.mxu0 %v1886
    %2486 = vmatpush1.bf16.msra.mxu0 %v1885
    %2487 = vmatprep.subr.bf16.mxu0 %v1882
    %2488 = vmatpush1.bf16.msra.mxu0 %v1881
    %2489 = vmatprep.subr.bf16.mxu0 %v1878
    %2490 = vmatpush1.bf16.msra.mxu0 %v1877
    %2491 = vmatprep.subr.bf16.mxu0 %v1874
    %2492 = vmatpush1.bf16.msra.mxu0 %v1873
    %2493 = vmatprep.subr.bf16.mxu0 %v1870
    %2494 = vmatpush1.bf16.msra.mxu0 %v1869
    %2495 = vmatprep.subr.bf16.mxu0 %v1866
    %2496 = vmatpush1.bf16.msra.mxu0 %v1865
    %2497 = vmatprep.subr.bf16.mxu0 %v1862
    %2498 = vmatpush1.bf16.msra.mxu0 %v1861
    %2499 = vmatprep.subr.bf16.mxu0 %v1858
    %2500 = vmatpush1.bf16.msra.mxu0 %v1857
    %2501 = vmatprep.subr.bf16.mxu0 %v1918
    %2502 = vmatpush2.bf16.msra.mxu0 %v1917
    %2503 = vmatprep.subr.bf16.mxu0 %v1914
    %2504 = vmatpush2.bf16.msra.mxu0 %v1913
    %2505 = vmatprep.subr.bf16.mxu0 %v1910
    %2506 = vmatpush2.bf16.msra.mxu0 %v1909
    %2507 = vmatprep.subr.bf16.mxu0 %v1906
    %2508 = vmatpush2.bf16.msra.mxu0 %v1905
    %2509 = vmatprep.subr.bf16.mxu0 %v1902
    %2510 = vmatpush2.bf16.msra.mxu0 %v1901
    %2511 = vmatprep.subr.bf16.mxu0 %v1898
    %2512 = vmatpush2.bf16.msra.mxu0 %v1897
    %2513 = vmatprep.subr.bf16.mxu0 %v1894
    %2514 = vmatpush2.bf16.msra.mxu0 %v1893
    %2515 = vmatprep.subr.bf16.mxu0 %v1890
    %2516 = vmatpush2.bf16.msra.mxu0 %v1889
    %2517 = vmatprep.mubr.bf16.mxu0 %v678
    %2518 = vmatmul.mubr.bf16.gmra.mxu0 %v677
    %v2519 = vpop.f32.mrf.mxu0
    %v2520 = vadd.f32 %v2479, %v2519
    %v2521 = vpop.f32.mrf.mxu0
    %v2522 = vadd.f32 %v2481, %v2521
    %v2523 = vpop.f32.mrf.mxu0
    %v2524 = vpop.f32.mrf.mxu0
    %2525 = vdwg.mxu0
    %2526 = vmatprep.subr.bf16.mxu0 %v1950
    %2527 = vmatpush1.bf16.msra.mxu0 %v1949
    %2528 = vmatprep.subr.bf16.mxu0 %v1946
    %2529 = vmatpush1.bf16.msra.mxu0 %v1945
    %2530 = vmatprep.subr.bf16.mxu0 %v1942
    %2531 = vmatpush1.bf16.msra.mxu0 %v1941
    %2532 = vmatprep.subr.bf16.mxu0 %v1938
    %2533 = vmatpush1.bf16.msra.mxu0 %v1937
    %2534 = vmatprep.subr.bf16.mxu0 %v1934
    %2535 = vmatpush1.bf16.msra.mxu0 %v1933
    %2536 = vmatprep.subr.bf16.mxu0 %v1930
    %2537 = vmatpush1.bf16.msra.mxu0 %v1929
    %2538 = vmatprep.subr.bf16.mxu0 %v1926
    %2539 = vmatpush1.bf16.msra.mxu0 %v1925
    %2540 = vmatprep.subr.bf16.mxu0 %v1922
    %2541 = vmatpush1.bf16.msra.mxu0 %v1921
    %2542 = vmatprep.subr.bf16.mxu0 %v1982
    %2543 = vmatpush2.bf16.msra.mxu0 %v1981
    %2544 = vmatprep.subr.bf16.mxu0 %v1978
    %2545 = vmatpush2.bf16.msra.mxu0 %v1977
    %2546 = vmatprep.subr.bf16.mxu0 %v1974
    %2547 = vmatpush2.bf16.msra.mxu0 %v1973
    %2548 = vmatprep.subr.bf16.mxu0 %v1970
    %2549 = vmatpush2.bf16.msra.mxu0 %v1969
    %2550 = vmatprep.subr.bf16.mxu0 %v1966
    %2551 = vmatpush2.bf16.msra.mxu0 %v1965
    %2552 = vmatprep.subr.bf16.mxu0 %v1962
    %2553 = vmatpush2.bf16.msra.mxu0 %v1961
    %2554 = vmatprep.subr.bf16.mxu0 %v1958
    %2555 = vmatpush2.bf16.msra.mxu0 %v1957
    %2556 = vmatprep.subr.bf16.mxu0 %v1954
    %2557 = vmatpush2.bf16.msra.mxu0 %v1953
    %2558 = vmatprep.mubr.bf16.mxu0 %v680
    %2559 = vmatmul.mubr.bf16.gmra.mxu0 %v679
    %v2560 = vpop.f32.mrf.mxu0
    %v2561 = vadd.f32 %v2520, %v2560
    %v2562 = vpop.f32.mrf.mxu0
    %v2563 = vadd.f32 %v2522, %v2562
    %v2564 = vpop.f32.mrf.mxu0
    %v2565 = vpop.f32.mrf.mxu0
    %2566 = vdwg.mxu0
    %2567 = vst [vmem:[#allocation10] sm:$0xff] %v2397
    %2568 = vst [vmem:[#allocation10 + $0x8] sm:$0xff] %v2399
    %2569 = vst [vmem:[#allocation10 + $0x10] sm:$0xff] %v2561
    %2570 = vst [vmem:[#allocation10 + $0x18] sm:$0xff] %v2563
    // Predicated region
    $region38: #{tpu_custom_call.1} parent=1 // pred_check
      _
    $region39: #{tpu_custom_call.1} parent=1 // pred_check_branch
      %2572 = sbr.rel (0) target = $region41
    $region40: #{tpu_custom_call.1} parent=1 // pred_region
      %s2574 = ssub.s32 512, 512
      %2575 = vsyncadd [#allocation4], %s2574
      %s2577 = sshll.u32 [#allocation10], 4
      %s2578 = int_to_ptr.vmem [resolvable:$true] %s2577
      %2580 = dma.vmem_to_hbm [thread:$0]  %s2578, 512, %s5, [#allocation4]
    $region41: #{tpu_custom_call.1} parent=1 // pred_fallthru
      _
    // Predicated region
    $region42: #{tpu_custom_call.1} parent=1 // pred_check
      _
    $region43: #{tpu_custom_call.1} parent=1 // pred_check_branch
      %2582 = sbr.rel (0) target = $region45
    $region44: #{tpu_custom_call.1} parent=1 // pred_region
      %2583 = dma.done [#allocation4], 512
    $region45: #{tpu_custom_call.1} parent=1 // pred_fallthru
      _
    %2584 = vsyncpa [#allocation3], 1
    %2585 = vsyncpa [#allocation6], 1
    %2586 = vsyncpa [#allocation9], 1
    %2587 = vsyncpa [#allocation4], 1

</llo_original>
